<compile_context>
chip_gen: v7x
topology: tpu7x:2x2x1
jax: 0.10.0
libtpu: 0.0.40
codegen_flags: <defaults>
</compile_context>

<pallas_src>
import functools
import numpy as np
import jax
import jax.numpy as jnp
from jax.experimental import pallas as pl
from jax.experimental.pallas import tpu as pltpu

LANE = 128


def _round_up(x, m):
    return ((x + m - 1) // m) * m


def _lrelu(x, slope):
    return jnp.where(x >= 0, x, slope * x)


def _sigmoid(x):
    # explicit formula so kernel and reference use the identical elementwise path
    return 1.0 / (1.0 + jnp.exp(-x))


def ivae_kernel(xu_ref, eps_ref,
                w1_ref, b1_ref, w2_ref, b2_ref,
                wf1_ref, bf1_ref, wf2_ref, bf2_ref,
                dec_ref, glvl_ref, z_ref,
                *, slope, lp):
    cdt = w1_ref.dtype                     # MXU operand dtype (f32 or bf16)
    xu = xu_ref[...]

    # ---- fused layer 1 for g / logv / logl: (tb, 3*HP) ----
    h = jnp.dot(xu, w1_ref[...], preferred_element_type=jnp.float32) + b1_ref[...]
    h = _lrelu(h, slope)

    # ---- fused layer 2 (block-diagonal weights): [g | logv | logl], (tb, 3*LP) ----
    glvl = jnp.dot(h.astype(cdt), w2_ref[...],
                   preferred_element_type=jnp.float32) + b2_ref[...]
    glvl_ref[...] = glvl

    # ---- reparameterization: z = g + eps * exp(0.5 * logv) ----
    g = glvl[:, 0:lp]
    logv = glvl[:, lp:2 * lp]
    z = g + eps_ref[...] * jnp.exp(0.5 * logv)
    z_ref[...] = z

    # ---- decoder MLP f: z -> hidden -> data, then sigmoid ----
    hf = jnp.dot(z.astype(cdt), wf1_ref[...],
                 preferred_element_type=jnp.float32) + bf1_ref[...]
    hf = _lrelu(hf, slope)
    logits = jnp.dot(hf.astype(cdt), wf2_ref[...],
                     preferred_element_type=jnp.float32) + bf2_ref[...]
    dec_ref[...] = _sigmoid(logits)


def init_raw_params(key, data_dim, aux_dim, latent_dim, hidden_dim, scale=0.1):
    """Weights stored as (in, out) so y = x @ W + b (== torch Linear with W = W_torch.T)."""
    def linear(k, din, dout):
        kw, kb = jax.random.split(k)
        w = scale * jax.random.normal(kw, (din, dout), jnp.float32)
        b = scale * jax.random.normal(kb, (1, dout), jnp.float32)
        return w, b

    ks = jax.random.split(key, 8)
    din_enc = data_dim + aux_dim
    return {
        "logl": (*linear(ks[0], aux_dim, hidden_dim), *linear(ks[1], hidden_dim, latent_dim)),
        "g":    (*linear(ks[2], din_enc, hidden_dim), *linear(ks[3], hidden_dim, latent_dim)),
        "logv": (*linear(ks[4], din_enc, hidden_dim), *linear(ks[5], hidden_dim, latent_dim)),
        "f":    (*linear(ks[6], latent_dim, hidden_dim), *linear(ks[7], hidden_dim, data_dim)),
    }


def pack_params(raw, data_dim, aux_dim, latent_dim, hidden_dim,
                compute_dtype=jnp.float32):
    """Host-side, one-time weight packing: fuse g/logv/logl into stacked / block-diagonal
    matrices and zero-pad every feature dim to a multiple of 128 lanes."""
    Din = data_dim + aux_dim
    DinP = _round_up(Din, LANE)
    HP = _round_up(hidden_dim, LANE)
    LP = _round_up(latent_dim, LANE)
    DoutP = _round_up(data_dim, LANE)

    def np_(a):
        return np.asarray(a, np.float32)

    gw1, gb1, gw2, gb2 = map(np_, raw["g"])
    vw1, vb1, vw2, vb2 = map(np_, raw["logv"])
    lw1, lb1, lw2, lb2 = map(np_, raw["logl"])
    fw1, fb1, fw2, fb2 = map(np_, raw["f"])

    H, L = hidden_dim, latent_dim

    # layer 1: input [x | u] (DinP lanes) -> [h_g | h_logv | h_logl] (3*HP lanes)
    w1 = np.zeros((DinP, 3 * HP), np.float32)
    w1[:Din, 0:H] = gw1
    w1[:Din, HP:HP + H] = vw1
    w1[data_dim:Din, 2 * HP:2 * HP + H] = lw1        # logl sees only u
    b1 = np.zeros((1, 3 * HP), np.float32)
    b1[:, 0:H] = gb1
    b1[:, HP:HP + H] = vb1
    b1[:, 2 * HP:2 * HP + H] = lb1

    # layer 2: block-diagonal -> [g | logv | logl] (3*LP lanes)
    w2 = np.zeros((3 * HP, 3 * LP), np.float32)
    w2[0:H, 0:L] = gw2
    w2[HP:HP + H, LP:LP + L] = vw2
    w2[2 * HP:2 * HP + H, 2 * LP:2 * LP + L] = lw2
    b2 = np.zeros((1, 3 * LP), np.float32)
    b2[:, 0:L] = gb2
    b2[:, LP:LP + L] = vb2
    b2[:, 2 * LP:2 * LP + L] = lb2

    # decoder f
    wf1 = np.zeros((LP, HP), np.float32)
    wf1[:L, :H] = fw1
    bf1 = np.zeros((1, HP), np.float32)
    bf1[:, :H] = fb1
    wf2 = np.zeros((HP, DoutP), np.float32)
    wf2[:H, :data_dim] = fw2
    bf2 = np.zeros((1, DoutP), np.float32)
    bf2[:, :data_dim] = fb2

    cdt = compute_dtype
    return {
        "w1": jnp.asarray(w1, cdt), "b1": jnp.asarray(b1, jnp.float32),
        "w2": jnp.asarray(w2, cdt), "b2": jnp.asarray(b2, jnp.float32),
        "wf1": jnp.asarray(wf1, cdt), "bf1": jnp.asarray(bf1, jnp.float32),
        "wf2": jnp.asarray(wf2, cdt), "bf2": jnp.asarray(bf2, jnp.float32),
        "dims": (data_dim, aux_dim, latent_dim, hidden_dim, DinP, HP, LP, DoutP),
    }


def discrete_ivae_forward(x, u, eps, packed, *, slope=0.1, tb_max=1024,
                          interpret=False):
    data_dim, aux_dim, latent_dim, hidden_dim, DinP, HP, LP, DoutP = packed["dims"]
    B = x.shape[0]
    Din = data_dim + aux_dim
    cdt = packed["w1"].dtype

    # Large batch tiles (multiple of 8); pad batch so the grid divides evenly.
    # tb=1024 keeps double-buffered activation blocks well inside the smallest
    # (v5e / v7x scoped) default VMEM limits.
    tb = min(tb_max, _round_up(B, 8))
    Bp = _round_up(B, tb)

    xu = jnp.concatenate([x, u], axis=1)
    xu = jnp.pad(xu, ((0, Bp - B), (0, DinP - Din))).astype(cdt)
    eps_p = jnp.pad(eps, ((0, Bp - B), (0, LP - latent_dim))).astype(jnp.float32)

    def rep(arr):
        # replicated constant block (full array) for weights / biases; constant
        # index_map across the grid -> fetched once, stays resident in VMEM
        return pl.BlockSpec(arr.shape, lambda i, _n=arr.ndim: (0,) * _n)

    kernel = functools.partial(ivae_kernel, slope=slope, lp=LP)

    # advisory cost hint for the XLA scheduler around the custom call
    flops_per_row = 2 * (DinP * 3 * HP + 3 * HP * 3 * LP + LP * HP + HP * DoutP)
    cost = pl.CostEstimate(
        flops=Bp * flops_per_row,
        transcendentals=Bp * (LP + DoutP),
        bytes_accessed=xu.size * xu.dtype.itemsize
        + eps_p.size * 4 + Bp * (DoutP + 3 * LP + LP) * 4,
    )

    dec_p, glvl_p, z_p = pl.pallas_call(
        kernel,
        out_shape=(
            jax.ShapeDtypeStruct((Bp, DoutP), jnp.float32),
            jax.ShapeDtypeStruct((Bp, 3 * LP), jnp.float32),
            jax.ShapeDtypeStruct((Bp, LP), jnp.float32),
        ),
        grid=(Bp // tb,),
        in_specs=[
            pl.BlockSpec((tb, DinP), lambda i: (i, 0)),
            pl.BlockSpec((tb, LP), lambda i: (i, 0)),
            rep(packed["w1"]), rep(packed["b1"]),
            rep(packed["w2"]), rep(packed["b2"]),
            rep(packed["wf1"]), rep(packed["bf1"]),
            rep(packed["wf2"]), rep(packed["bf2"]),
        ],
        out_specs=(
            pl.BlockSpec((tb, DoutP), lambda i: (i, 0)),
            pl.BlockSpec((tb, 3 * LP), lambda i: (i, 0)),
            pl.BlockSpec((tb, LP), lambda i: (i, 0)),
        ),
        compiler_params=pltpu.CompilerParams(
            dimension_semantics=("parallel",)),
        cost_estimate=cost,
        interpret=interpret,
    )(xu, eps_p,
      packed["w1"], packed["b1"], packed["w2"], packed["b2"],
      packed["wf1"], packed["bf1"], packed["wf2"], packed["bf2"])

    # strip lane / batch padding and split the fused [g | logv | logl] output
    dec = dec_p[:B, :data_dim]
    g = glvl_p[:B, 0:latent_dim]
    logv = glvl_p[:B, LP:LP + latent_dim]
    logl = glvl_p[:B, 2 * LP:2 * LP + latent_dim]
    z = z_p[:B, :latent_dim]
    prior_mean = jnp.zeros((1,), jnp.float32)
    return dec, (g, logv), z, (prior_mean, logl)


def ref_forward(x, u, eps, raw, slope=0.1):
    """Pure-JAX mirror of DiscreteIVAE.forward (eps supplied instead of randn_like)."""
    def mlp2(inp, w1, b1, w2, b2):
        h = inp @ w1 + b1
        h = jnp.where(h >= 0, h, slope * h)
        return h @ w2 + b2

    xu = jnp.concatenate([x, u], axis=1)
    logl = mlp2(u, *raw["logl"])
    g = mlp2(xu, *raw["g"])
    logv = mlp2(xu, *raw["logv"])
    z = g + eps * jnp.exp(0.5 * logv)
    dec = 1.0 / (1.0 + jnp.exp(-mlp2(z, *raw["f"])))
    prior_mean = jnp.zeros((1,), jnp.float32)
    return dec, (g, logv), z, (prior_mean, logl)


if __name__ == "__main__":
    # Small shapes consistent with DiscreteIVAE defaults: hidden_dim=20, lrelu slope=0.1.
    B, latent_dim, data_dim, aux_dim, hidden_dim, slope = 64, 8, 16, 8, 20, 0.1

    key = jax.random.PRNGKey(0)
    kx, ku, ke, kp = jax.random.split(key, 4)
    x = jax.random.uniform(kx, (B, data_dim), jnp.float32)     # data in [0,1)
    u = jax.random.normal(ku, (B, aux_dim), jnp.float32)
    # TODO(synk): torch.randn_like eps is sampled host-side and passed in (could use
    # pltpu.prng_random_bits + Box-Muller in-kernel instead).
    eps = jax.random.normal(ke, (B, latent_dim), jnp.float32)

    raw = init_raw_params(kp, data_dim, aux_dim, latent_dim, hidden_dim)

    # ---- f32 run: tight check against the pure-JAX reference ----
    packed = pack_params(raw, data_dim, aux_dim, latent_dim, hidden_dim,
                         compute_dtype=jnp.float32)
    out = jax.block_until_ready(discrete_ivae_forward(x, u, eps, packed, slope=slope))
    ref = ref_forward(x, u, eps, raw, slope=slope)

    dec, (g, logv), z, (_, logl) = out
    rdec, (rg, rlogv), rz, (_, rlogl) = ref
    for a, b in [(dec, rdec), (g, rg), (logv, rlogv), (z, rz), (logl, rlogl)]:
        np.testing.assert_allclose(np.asarray(a), np.asarray(b), rtol=1e-4, atol=1e-4)

    # ---- bf16-operand run (halves weight/activation HBM traffic, f32 accumulation) ----
    packed_bf16 = pack_params(raw, data_dim, aux_dim, latent_dim, hidden_dim,
                              compute_dtype=jnp.bfloat16)
    dec16, _, z16, _ = jax.block_until_ready(
        discrete_ivae_forward(x, u, eps, packed_bf16, slope=slope))
    np.testing.assert_allclose(np.asarray(dec16), np.asarray(rdec), rtol=0.05, atol=0.05)
    np.testing.assert_allclose(np.asarray(z16), np.asarray(rz), rtol=0.05, atol=0.05)

    print("KERNEL_OK")
</pallas_src>

<mosaic_0001>
module attributes {stable_mosaic.version = 11 : i64} {
  func.func @ivae_kernel(%arg0: i32, %arg1: memref<64x128xf32, #tpu.memory_space<vmem>>, %arg2: memref<64x128xf32, #tpu.memory_space<vmem>>, %arg3: memref<128x384xf32, #tpu.memory_space<vmem>>, %arg4: memref<1x384xf32, #tpu.memory_space<vmem>>, %arg5: memref<384x384xf32, #tpu.memory_space<vmem>>, %arg6: memref<1x384xf32, #tpu.memory_space<vmem>>, %arg7: memref<128x128xf32, #tpu.memory_space<vmem>>, %arg8: memref<1x128xf32, #tpu.memory_space<vmem>>, %arg9: memref<128x128xf32, #tpu.memory_space<vmem>>, %arg10: memref<1x128xf32, #tpu.memory_space<vmem>>, %arg11: memref<64x128xf32, #tpu.memory_space<vmem>>, %arg12: memref<64x384xf32, #tpu.memory_space<vmem>>, %arg13: memref<64x128xf32, #tpu.memory_space<vmem>>) attributes {dimension_semantics = [#tpu.dimension_semantics<parallel>], iteration_bounds = array<i64: 1>, scalar_prefetch = 0 : i64, scratch_operands = 0 : i64, tpu.core_type = #tpu.core_type<tc>, window_params = [{transform_indices = @transform_0, window_bounds = array<i64: 64, 128>}, {transform_indices = @transform_1, window_bounds = array<i64: 64, 128>}, {pipeline_mode = #tpu.pipeline_mode<synchronous>, transform_indices = @transform_2, window_bounds = array<i64: 128, 384>}, {pipeline_mode = #tpu.pipeline_mode<synchronous>, transform_indices = @transform_3, window_bounds = array<i64: 1, 384>}, {pipeline_mode = #tpu.pipeline_mode<synchronous>, transform_indices = @transform_4, window_bounds = array<i64: 384, 384>}, {pipeline_mode = #tpu.pipeline_mode<synchronous>, transform_indices = @transform_5, window_bounds = array<i64: 1, 384>}, {pipeline_mode = #tpu.pipeline_mode<synchronous>, transform_indices = @transform_6, window_bounds = array<i64: 128, 128>}, {pipeline_mode = #tpu.pipeline_mode<synchronous>, transform_indices = @transform_7, window_bounds = array<i64: 1, 128>}, {pipeline_mode = #tpu.pipeline_mode<synchronous>, transform_indices = @transform_8, window_bounds = array<i64: 128, 128>}, {pipeline_mode = #tpu.pipeline_mode<synchronous>, transform_indices = @transform_9, window_bounds = array<i64: 1, 128>}, {transform_indices = @transform_10, window_bounds = array<i64: 64, 128>}, {transform_indices = @transform_11, window_bounds = array<i64: 64, 384>}, {transform_indices = @transform_12, window_bounds = array<i64: 64, 128>}]} {
    %c0 = arith.constant 0 : index
    %c0_0 = arith.constant 0 : index
    %0 = vector.load %arg1[%c0, %c0_0] : memref<64x128xf32, #tpu.memory_space<vmem>>, vector<64x128xf32>
    %c0_1 = arith.constant 0 : index
    %c0_2 = arith.constant 0 : index
    %1 = vector.load %arg3[%c0_1, %c0_2] : memref<128x384xf32, #tpu.memory_space<vmem>>, vector<128x384xf32>
    %cst = arith.constant dense<0.000000e+00> : vector<64x384xf32>
    %2 = tpu.matmul %0, %1, %cst {dimension_numbers = #tpu.dot_dimension_numbers<[1], [0], [0], [1], [0, 0, 1, 1], [], []>} : vector<64x128xf32>, vector<128x384xf32>, vector<64x384xf32> -> vector<64x384xf32>
    %c0_3 = arith.constant 0 : index
    %c0_4 = arith.constant 0 : index
    %3 = vector.load %arg4[%c0_3, %c0_4] : memref<1x384xf32, #tpu.memory_space<vmem>>, vector<1x384xf32>
    %4 = vector.broadcast %3 : vector<1x384xf32> to vector<64x384xf32>
    %5 = arith.addf %2, %4 : vector<64x384xf32>
    %cst_5 = arith.constant 0.000000e+00 : f32
    %6 = vector.broadcast %cst_5 : f32 to vector<64x384xf32>
    %7 = arith.cmpf oge, %5, %6 : vector<64x384xf32>
    %cst_6 = arith.constant 1.000000e-01 : f32
    %8 = vector.broadcast %cst_6 : f32 to vector<64x384xf32>
    %9 = arith.mulf %8, %5 : vector<64x384xf32>
    %10 = arith.select %7, %5, %9 : vector<64x384xi1>, vector<64x384xf32>
    %c0_7 = arith.constant 0 : index
    %c0_8 = arith.constant 0 : index
    %11 = vector.load %arg5[%c0_7, %c0_8] : memref<384x384xf32, #tpu.memory_space<vmem>>, vector<384x384xf32>
    %cst_9 = arith.constant dense<0.000000e+00> : vector<64x384xf32>
    %12 = tpu.matmul %10, %11, %cst_9 {dimension_numbers = #tpu.dot_dimension_numbers<[1], [0], [0], [1], [0, 0, 1, 1], [], []>} : vector<64x384xf32>, vector<384x384xf32>, vector<64x384xf32> -> vector<64x384xf32>
    %c0_10 = arith.constant 0 : index
    %c0_11 = arith.constant 0 : index
    %13 = vector.load %arg6[%c0_10, %c0_11] : memref<1x384xf32, #tpu.memory_space<vmem>>, vector<1x384xf32>
    %14 = vector.broadcast %13 : vector<1x384xf32> to vector<64x384xf32>
    %15 = arith.addf %12, %14 : vector<64x384xf32>
    %c0_12 = arith.constant 0 : index
    %c0_13 = arith.constant 0 : index
    %16 = vector.load %arg12[%c0_12, %c0_13] : memref<64x384xf32, #tpu.memory_space<vmem>>, vector<64x384xf32>
    tpu.vector_store %arg12[%c0_12, %c0_13], %15 {strides = array<i32>} : memref<64x384xf32, #tpu.memory_space<vmem>>, vector<64x384xf32>,
    %17 = vector.extract_strided_slice %15 {offsets = [0, 0], sizes = [64, 128], strides = [1, 1]} : vector<64x384xf32> to vector<64x128xf32>
    %18 = vector.extract_strided_slice %15 {offsets = [0, 128], sizes = [64, 128], strides = [1, 1]} : vector<64x384xf32> to vector<64x128xf32>
    %c0_14 = arith.constant 0 : index
    %c0_15 = arith.constant 0 : index
    %19 = vector.load %arg2[%c0_14, %c0_15] : memref<64x128xf32, #tpu.memory_space<vmem>>, vector<64x128xf32>
    %cst_16 = arith.constant 5.000000e-01 : f32
    %20 = vector.broadcast %cst_16 : f32 to vector<64x128xf32>
    %21 = arith.mulf %20, %18 : vector<64x128xf32>
    %22 = math.exp %21 : vector<64x128xf32>
    %23 = arith.mulf %19, %22 : vector<64x128xf32>
    %24 = arith.addf %17, %23 : vector<64x128xf32>
    %c0_17 = arith.constant 0 : index
    %c0_18 = arith.constant 0 : index
    %25 = vector.load %arg13[%c0_17, %c0_18] : memref<64x128xf32, #tpu.memory_space<vmem>>, vector<64x128xf32>
    tpu.vector_store %arg13[%c0_17, %c0_18], %24 {strides = array<i32>} : memref<64x128xf32, #tpu.memory_space<vmem>>, vector<64x128xf32>,
    %c0_19 = arith.constant 0 : index
    %c0_20 = arith.constant 0 : index
    %26 = vector.load %arg7[%c0_19, %c0_20] : memref<128x128xf32, #tpu.memory_space<vmem>>, vector<128x128xf32>
    %cst_21 = arith.constant dense<0.000000e+00> : vector<64x128xf32>
    %27 = tpu.matmul %24, %26, %cst_21 {dimension_numbers = #tpu.dot_dimension_numbers<[1], [0], [0], [1], [0, 0, 1, 1], [], []>} : vector<64x128xf32>, vector<128x128xf32>, vector<64x128xf32> -> vector<64x128xf32>
    %c0_22 = arith.constant 0 : index
    %c0_23 = arith.constant 0 : index
    %28 = vector.load %arg8[%c0_22, %c0_23] : memref<1x128xf32, #tpu.memory_space<vmem>>, vector<1x128xf32>
    %29 = vector.broadcast %28 : vector<1x128xf32> to vector<64x128xf32>
    %30 = arith.addf %27, %29 : vector<64x128xf32>
    %cst_24 = arith.constant 0.000000e+00 : f32
    %31 = vector.broadcast %cst_24 : f32 to vector<64x128xf32>
    %32 = arith.cmpf oge, %30, %31 : vector<64x128xf32>
    %cst_25 = arith.constant 1.000000e-01 : f32
    %33 = vector.broadcast %cst_25 : f32 to vector<64x128xf32>
    %34 = arith.mulf %33, %30 : vector<64x128xf32>
    %35 = arith.select %32, %30, %34 : vector<64x128xi1>, vector<64x128xf32>
    %c0_26 = arith.constant 0 : index
    %c0_27 = arith.constant 0 : index
    %36 = vector.load %arg9[%c0_26, %c0_27] : memref<128x128xf32, #tpu.memory_space<vmem>>, vector<128x128xf32>
    %cst_28 = arith.constant dense<0.000000e+00> : vector<64x128xf32>
    %37 = tpu.matmul %35, %36, %cst_28 {dimension_numbers = #tpu.dot_dimension_numbers<[1], [0], [0], [1], [0, 0, 1, 1], [], []>} : vector<64x128xf32>, vector<128x128xf32>, vector<64x128xf32> -> vector<64x128xf32>
    %c0_29 = arith.constant 0 : index
    %c0_30 = arith.constant 0 : index
    %38 = vector.load %arg10[%c0_29, %c0_30] : memref<1x128xf32, #tpu.memory_space<vmem>>, vector<1x128xf32>
    %39 = vector.broadcast %38 : vector<1x128xf32> to vector<64x128xf32>
    %40 = arith.addf %37, %39 : vector<64x128xf32>
    %cst_31 = arith.constant 0.000000e+00 : f32
    %41 = vector.broadcast %cst_31 : f32 to vector<64x128xf32>
    %42 = arith.subf %41, %40 : vector<64x128xf32>
    %43 = math.exp %42 : vector<64x128xf32>
    %cst_32 = arith.constant 1.000000e+00 : f32
    %44 = vector.broadcast %cst_32 : f32 to vector<64x128xf32>
    %45 = arith.addf %44, %43 : vector<64x128xf32>
    %cst_33 = arith.constant 1.000000e+00 : f32
    %46 = vector.broadcast %cst_33 : f32 to vector<64x128xf32>
    %47 = arith.divf %46, %45 : vector<64x128xf32>
    %c0_34 = arith.constant 0 : index
    %c0_35 = arith.constant 0 : index
    %48 = vector.load %arg11[%c0_34, %c0_35] : memref<64x128xf32, #tpu.memory_space<vmem>>, vector<64x128xf32>
    tpu.vector_store %arg11[%c0_34, %c0_35], %47 {strides = array<i32>} : memref<64x128xf32, #tpu.memory_space<vmem>>, vector<64x128xf32>,
    return
  }
  func.func @transform_0(%arg0: i32) -> (i32, i32) {
    %c0_i32 = arith.constant 0 : i32
    %c0_i32_0 = arith.constant 0 : i32
    return %arg0, %c0_i32 : i32, i32
  }
  func.func @transform_1(%arg0: i32) -> (i32, i32) {
    %c0_i32 = arith.constant 0 : i32
    %c0_i32_0 = arith.constant 0 : i32
    return %arg0, %c0_i32 : i32, i32
  }
  func.func @transform_2(%arg0: i32) -> (i32, i32) {
    %c0_i32 = arith.constant 0 : i32
    %c0_i32_0 = arith.constant 0 : i32
    %c0_i32_1 = arith.constant 0 : i32
    return %c0_i32, %c0_i32_0 : i32, i32
  }
  func.func @transform_3(%arg0: i32) -> (i32, i32) {
    %c0_i32 = arith.constant 0 : i32
    %c0_i32_0 = arith.constant 0 : i32
    %c0_i32_1 = arith.constant 0 : i32
    return %c0_i32, %c0_i32_0 : i32, i32
  }
  func.func @transform_4(%arg0: i32) -> (i32, i32) {
    %c0_i32 = arith.constant 0 : i32
    %c0_i32_0 = arith.constant 0 : i32
    %c0_i32_1 = arith.constant 0 : i32
    return %c0_i32, %c0_i32_0 : i32, i32
  }
  func.func @transform_5(%arg0: i32) -> (i32, i32) {
    %c0_i32 = arith.constant 0 : i32
    %c0_i32_0 = arith.constant 0 : i32
    %c0_i32_1 = arith.constant 0 : i32
    return %c0_i32, %c0_i32_0 : i32, i32
  }
  func.func @transform_6(%arg0: i32) -> (i32, i32) {
    %c0_i32 = arith.constant 0 : i32
    %c0_i32_0 = arith.constant 0 : i32
    %c0_i32_1 = arith.constant 0 : i32
    return %c0_i32, %c0_i32_0 : i32, i32
  }
  func.func @transform_7(%arg0: i32) -> (i32, i32) {
    %c0_i32 = arith.constant 0 : i32
    %c0_i32_0 = arith.constant 0 : i32
    %c0_i32_1 = arith.constant 0 : i32
    return %c0_i32, %c0_i32_0 : i32, i32
  }
  func.func @transform_8(%arg0: i32) -> (i32, i32) {
    %c0_i32 = arith.constant 0 : i32
    %c0_i32_0 = arith.constant 0 : i32
    %c0_i32_1 = arith.constant 0 : i32
    return %c0_i32, %c0_i32_0 : i32, i32
  }
  func.func @transform_9(%arg0: i32) -> (i32, i32) {
    %c0_i32 = arith.constant 0 : i32
    %c0_i32_0 = arith.constant 0 : i32
    %c0_i32_1 = arith.constant 0 : i32
    return %c0_i32, %c0_i32_0 : i32, i32
  }
  func.func @transform_10(%arg0: i32) -> (i32, i32) {
    %c0_i32 = arith.constant 0 : i32
    %c0_i32_0 = arith.constant 0 : i32
    return %arg0, %c0_i32 : i32, i32
  }
  func.func @transform_11(%arg0: i32) -> (i32, i32) {
    %c0_i32 = arith.constant 0 : i32
    %c0_i32_0 = arith.constant 0 : i32
    return %arg0, %c0_i32 : i32, i32
  }
  func.func @transform_12(%arg0: i32) -> (i32, i32) {
    %c0_i32 = arith.constant 0 : i32
    %c0_i32_0 = arith.constant 0 : i32
    return %arg0, %c0_i32 : i32, i32
  }
}

</mosaic_0001>

<llo_original>
// kernel: tpu_custom_call.1
$region0: #{tpu_custom_call.1}
  #allocation0 [shape = 'u32[]', space=smem, size = 0x4, offset = 0x4, fixed_abs, tag = 'smem constant byte address 0x4 - core index']
  #allocation1 [shape = 'u32[144,128]{1,0:T(1,128)}', space=vmem, size = 0x12000, scoped, tag = 'internal scratch']
  %s0 = inlined_call_operand.hbm [shape: f32[64,128], index: 0, kind: input, shape index: {}]
  %s1 = inlined_call_operand.hbm [shape: f32[64,128], index: 1, kind: input, shape index: {}]
  %s2 = inlined_call_operand.hbm [shape: f32[128,384], index: 2, kind: input, shape index: {}]
  %s3 = inlined_call_operand.vmem [shape: f32[1,384], index: 3, kind: input, shape index: {}]
  %s4 = inlined_call_operand.hbm [shape: f32[384,384], index: 4, kind: input, shape index: {}]
  %s5 = inlined_call_operand.vmem [shape: f32[1,384], index: 5, kind: input, shape index: {}]
  %s6 = inlined_call_operand.hbm [shape: f32[128,128], index: 6, kind: input, shape index: {}]
  %s7 = inlined_call_operand.vmem [shape: f32[1,128], index: 7, kind: input, shape index: {}]
  %s8 = inlined_call_operand.hbm [shape: f32[128,128], index: 8, kind: input, shape index: {}]
  %s9 = inlined_call_operand.vmem [shape: f32[1,128], index: 9, kind: input, shape index: {}]
  %s10 = inlined_call_operand.hbm [shape: f32[64,128], index: 10, kind: output, shape index: {0}]
  %s11 = inlined_call_operand.hbm [shape: f32[64,384], index: 11, kind: output, shape index: {1}]
  %s12 = inlined_call_operand.hbm [shape: f32[64,128], index: 12, kind: output, shape index: {2}]
  %13 = xla_tuple %s10, %s11, %s12
  %s14 = sld [smem:[#allocation0]]
  $region90: #{tpu_custom_call.1} parent=0
    _
  %s16 = ssub.s32 1, %s14
  %s17 = scalar_select 0, %s16, %s14
  $region1: #{tpu_custom_call.1} parent=0
    #allocation2 [shape = 'u8[32768]{0}', space=vmem, size = 0x8000, scoped, tag = 'input window, operand 0, single buffered']
    #allocation3 [shape = 's32[1]{0}', space=sflag, size = 0x4, scoped, tag = 'scoped memory for tpu_custom_call.1']
    #allocation4 [shape = 's32[1]{0}', space=sflag, size = 0x4, scoped, tag = 'scoped memory for tpu_custom_call.1']
    #allocation5 [shape = 'u8[32768]{0}', space=vmem, size = 0x8000, scoped, tag = 'input window, operand 1, single buffered']
    #allocation6 [shape = 's32[1]{0}', space=sflag, size = 0x4, scoped, tag = 'scoped memory for tpu_custom_call.1']
    #allocation7 [shape = 'u8[196608]{0}', space=vmem, size = 0x30000, scoped, tag = 'input window, operand 2, single buffered']
    #allocation8 [shape = 'u8[589824]{0}', space=vmem, size = 0x90000, scoped, tag = 'input window, operand 4, single buffered']
    #allocation9 [shape = 's32[1]{0}', space=sflag, size = 0x4, scoped, tag = 'scoped memory for tpu_custom_call.1']
    #allocation10 [shape = 'u8[65536]{0}', space=vmem, size = 0x10000, scoped, tag = 'input window, operand 6, single buffered']
    #allocation11 [shape = 'u8[65536]{0}', space=vmem, size = 0x10000, scoped, tag = 'input window, operand 8, single buffered']
    #allocation12 [shape = 's32[1]{0}', space=sflag, size = 0x4, scoped, tag = 'scoped memory for tpu_custom_call.1']
    #allocation13 [shape = 'u8[32768]{0}', space=vmem, size = 0x8000, scoped, tag = 'output window, operand 0, single buffered']
    #allocation14 [shape = 'u8[98304]{0}', space=vmem, size = 0x18000, scoped, tag = 'output window, operand 1, single buffered']
    #allocation15 [shape = 's32[1]{0}', space=sflag, size = 0x4, scoped, tag = 'scoped memory for tpu_custom_call.1']
    #allocation16 [shape = 'u8[32768]{0}', space=vmem, size = 0x8000, scoped, tag = 'output window, operand 2, single buffered']
    %18 = vsyncpa [#allocation3], 0
    %19 = vsyncpa [#allocation6], 0
    %20 = vsyncpa [#allocation9], 0
    %21 = vsyncpa [#allocation12], 0
    %22 = vsyncpa [#allocation4], 0
    %23 = vsyncpa [#allocation15], 0
    // Predicated region
    $region2: #{tpu_custom_call.1} parent=1 // pred_check
      _
    $region3: #{tpu_custom_call.1} parent=1 // pred_check_branch
      %25 = sbr.rel (0) target = $region5
    $region4: #{tpu_custom_call.1} parent=1 // pred_region
      %s27 = ssub.s32 1024, 1024
      %28 = vsyncadd [#allocation3], %s27
      %s29 = sshll.u32 [#allocation2], 4
      %s30 = int_to_ptr.vmem [resolvable:$true] %s29
      %35 = dma.hbm_to_vmem [thread:$0]  %s0, 1024, %s30, [#allocation3], 128, 128, 8
    $region5: #{tpu_custom_call.1} parent=1 // pred_fallthru
      _
    // Predicated region
    $region6: #{tpu_custom_call.1} parent=1 // pred_check
      _
    $region7: #{tpu_custom_call.1} parent=1 // pred_check_branch
      %37 = sbr.rel (0) target = $region9
    $region8: #{tpu_custom_call.1} parent=1 // pred_region
      %s39 = ssub.s32 1024, 1024
      %40 = vsyncadd [#allocation6], %s39
      %s41 = sshll.u32 [#allocation5], 4
      %s42 = int_to_ptr.vmem [resolvable:$true] %s41
      %47 = dma.hbm_to_vmem [thread:$0]  %s1, 1024, %s42, [#allocation6], 128, 128, 8
    $region9: #{tpu_custom_call.1} parent=1 // pred_fallthru
      _
    // Predicated region
    $region10: #{tpu_custom_call.1} parent=1 // pred_check
      _
    $region11: #{tpu_custom_call.1} parent=1 // pred_check_branch
      %49 = sbr.rel (0) target = $region13
    $region12: #{tpu_custom_call.1} parent=1 // pred_region
      %s51 = ssub.s32 6144, 6144
      %52 = vsyncadd [#allocation6], %s51
      %s53 = sshll.u32 [#allocation7], 4
      %s54 = int_to_ptr.vmem [resolvable:$true] %s53
      %59 = dma.hbm_to_vmem [thread:$0]  %s2, 6144, %s54, [#allocation6], 384, 384, 24
    $region13: #{tpu_custom_call.1} parent=1 // pred_fallthru
      _
    // Predicated region
    $region14: #{tpu_custom_call.1} parent=1 // pred_check
      _
    $region15: #{tpu_custom_call.1} parent=1 // pred_check_branch
      %61 = sbr.rel (0) target = $region17
    $region16: #{tpu_custom_call.1} parent=1 // pred_region
      _
    $region17: #{tpu_custom_call.1} parent=1 // pred_fallthru
      _
    // Predicated region
    $region18: #{tpu_custom_call.1} parent=1 // pred_check
      _
    $region19: #{tpu_custom_call.1} parent=1 // pred_check_branch
      %63 = sbr.rel (0) target = $region21
    $region20: #{tpu_custom_call.1} parent=1 // pred_region
      %s65 = ssub.s32 18432, 18432
      %66 = vsyncadd [#allocation9], %s65
      %s67 = sshll.u32 [#allocation8], 4
      %s68 = int_to_ptr.vmem [resolvable:$true] %s67
      %73 = dma.hbm_to_vmem [thread:$0]  %s4, 18432, %s68, [#allocation9], 384, 384, 24
    $region21: #{tpu_custom_call.1} parent=1 // pred_fallthru
      _
    // Predicated region
    $region22: #{tpu_custom_call.1} parent=1 // pred_check
      _
    $region23: #{tpu_custom_call.1} parent=1 // pred_check_branch
      %75 = sbr.rel (0) target = $region25
    $region24: #{tpu_custom_call.1} parent=1 // pred_region
      _
    $region25: #{tpu_custom_call.1} parent=1 // pred_fallthru
      _
    // Predicated region
    $region26: #{tpu_custom_call.1} parent=1 // pred_check
      _
    $region27: #{tpu_custom_call.1} parent=1 // pred_check_branch
      %77 = sbr.rel (0) target = $region29
    $region28: #{tpu_custom_call.1} parent=1 // pred_region
      %s79 = ssub.s32 2048, 2048
      %80 = vsyncadd [#allocation9], %s79
      %s81 = sshll.u32 [#allocation10], 4
      %s82 = int_to_ptr.vmem [resolvable:$true] %s81
      %87 = dma.hbm_to_vmem [thread:$0]  %s6, 2048, %s82, [#allocation9], 128, 128, 8
    $region29: #{tpu_custom_call.1} parent=1 // pred_fallthru
      _
    // Predicated region
    $region30: #{tpu_custom_call.1} parent=1 // pred_check
      _
    $region31: #{tpu_custom_call.1} parent=1 // pred_check_branch
      %89 = sbr.rel (0) target = $region33
    $region32: #{tpu_custom_call.1} parent=1 // pred_region
      _
    $region33: #{tpu_custom_call.1} parent=1 // pred_fallthru
      _
    // Predicated region
    $region34: #{tpu_custom_call.1} parent=1 // pred_check
      _
    $region35: #{tpu_custom_call.1} parent=1 // pred_check_branch
      %91 = sbr.rel (0) target = $region37
    $region36: #{tpu_custom_call.1} parent=1 // pred_region
      %s93 = ssub.s32 2048, 2048
      %94 = vsyncadd [#allocation12], %s93
      %s95 = sshll.u32 [#allocation11], 4
      %s96 = int_to_ptr.vmem [resolvable:$true] %s95
      %101 = dma.hbm_to_vmem [thread:$0]  %s8, 2048, %s96, [#allocation12], 128, 128, 8
    $region37: #{tpu_custom_call.1} parent=1 // pred_fallthru
      _
    // Predicated region
    $region38: #{tpu_custom_call.1} parent=1 // pred_check
      _
    $region39: #{tpu_custom_call.1} parent=1 // pred_check_branch
      %103 = sbr.rel (0) target = $region41
    $region40: #{tpu_custom_call.1} parent=1 // pred_region
      _
    $region41: #{tpu_custom_call.1} parent=1 // pred_fallthru
      _
    // Predicated region
    $region42: #{tpu_custom_call.1} parent=1 // pred_check
      _
    $region43: #{tpu_custom_call.1} parent=1 // pred_check_branch
      %105 = sbr.rel (0) target = $region45
    $region44: #{tpu_custom_call.1} parent=1 // pred_region
      %106 = dma.done [#allocation3], 1024
    $region45: #{tpu_custom_call.1} parent=1 // pred_fallthru
      _
    // Predicated region
    $region46: #{tpu_custom_call.1} parent=1 // pred_check
      _
    $region47: #{tpu_custom_call.1} parent=1 // pred_check_branch
      %108 = sbr.rel (0) target = $region49
    $region48: #{tpu_custom_call.1} parent=1 // pred_region
      %109 = dma.done [#allocation6], 1024
    $region49: #{tpu_custom_call.1} parent=1 // pred_fallthru
      _
    // Predicated region
    $region50: #{tpu_custom_call.1} parent=1 // pred_check
      _
    $region51: #{tpu_custom_call.1} parent=1 // pred_check_branch
      %111 = sbr.rel (0) target = $region53
    $region52: #{tpu_custom_call.1} parent=1 // pred_region
      %112 = dma.done [#allocation6], 6144
    $region53: #{tpu_custom_call.1} parent=1 // pred_fallthru
      _
    // Predicated region
    $region54: #{tpu_custom_call.1} parent=1 // pred_check
      _
    $region55: #{tpu_custom_call.1} parent=1 // pred_check_branch
      %114 = sbr.rel (0) target = $region57
    $region56: #{tpu_custom_call.1} parent=1 // pred_region
      %115 = dma.done [#allocation9], 18432
    $region57: #{tpu_custom_call.1} parent=1 // pred_fallthru
      _
    // Predicated region
    $region58: #{tpu_custom_call.1} parent=1 // pred_check
      _
    $region59: #{tpu_custom_call.1} parent=1 // pred_check_branch
      %117 = sbr.rel (0) target = $region61
    $region60: #{tpu_custom_call.1} parent=1 // pred_region
      %118 = dma.done [#allocation9], 2048
    $region61: #{tpu_custom_call.1} parent=1 // pred_fallthru
      _
    // Predicated region
    $region62: #{tpu_custom_call.1} parent=1 // pred_check
      _
    $region63: #{tpu_custom_call.1} parent=1 // pred_check_branch
      %120 = sbr.rel (0) target = $region65
    $region64: #{tpu_custom_call.1} parent=1 // pred_region
      %121 = dma.done [#allocation12], 2048
    $region65: #{tpu_custom_call.1} parent=1 // pred_fallthru
      _
    %v122 = vld [vmem:[#allocation2] sm:$0xff]
    %v123 = vld [vmem:[#allocation2 + $0x8] sm:$0xff]
    %v124 = vld [vmem:[#allocation2 + $0x10] sm:$0xff]
    %v125 = vld [vmem:[#allocation2 + $0x18] sm:$0xff]
    %v126 = vld [vmem:[#allocation2 + $0x20] sm:$0xff]
    %v127 = vld [vmem:[#allocation2 + $0x28] sm:$0xff]
    %v128 = vld [vmem:[#allocation2 + $0x30] sm:$0xff]
    %v129 = vld [vmem:[#allocation2 + $0x38] sm:$0xff]
    %v130 = vld [vmem:[#allocation7] sm:$0xff]
    %v131 = vld [vmem:[#allocation7 + $0x8] sm:$0xff]
    %v132 = vld [vmem:[#allocation7 + $0x10] sm:$0xff]
    %v133 = vld [vmem:[#allocation7 + $0x18] sm:$0xff]
    %v134 = vld [vmem:[#allocation7 + $0x20] sm:$0xff]
    %v135 = vld [vmem:[#allocation7 + $0x28] sm:$0xff]
    %v136 = vld [vmem:[#allocation7 + $0x30] sm:$0xff]
    %v137 = vld [vmem:[#allocation7 + $0x38] sm:$0xff]
    %v138 = vld [vmem:[#allocation7 + $0x40] sm:$0xff]
    %v139 = vld [vmem:[#allocation7 + $0x48] sm:$0xff]
    %v140 = vld [vmem:[#allocation7 + $0x50] sm:$0xff]
    %v141 = vld [vmem:[#allocation7 + $0x58] sm:$0xff]
    %v142 = vld [vmem:[#allocation7 + $0x60] sm:$0xff]
    %v143 = vld [vmem:[#allocation7 + $0x68] sm:$0xff]
    %v144 = vld [vmem:[#allocation7 + $0x70] sm:$0xff]
    %v145 = vld [vmem:[#allocation7 + $0x78] sm:$0xff]
    %v146 = vld [vmem:[#allocation7 + $0x80] sm:$0xff]
    %v147 = vld [vmem:[#allocation7 + $0x88] sm:$0xff]
    %v148 = vld [vmem:[#allocation7 + $0x90] sm:$0xff]
    %v149 = vld [vmem:[#allocation7 + $0x98] sm:$0xff]
    %v150 = vld [vmem:[#allocation7 + $0xa0] sm:$0xff]
    %v151 = vld [vmem:[#allocation7 + $0xa8] sm:$0xff]
    %v152 = vld [vmem:[#allocation7 + $0xb0] sm:$0xff]
    %v153 = vld [vmem:[#allocation7 + $0xb8] sm:$0xff]
    %v154 = vld [vmem:[#allocation7 + $0xc0] sm:$0xff]
    %v155 = vld [vmem:[#allocation7 + $0xc8] sm:$0xff]
    %v156 = vld [vmem:[#allocation7 + $0xd0] sm:$0xff]
    %v157 = vld [vmem:[#allocation7 + $0xd8] sm:$0xff]
    %v158 = vld [vmem:[#allocation7 + $0xe0] sm:$0xff]
    %v159 = vld [vmem:[#allocation7 + $0xe8] sm:$0xff]
    %v160 = vld [vmem:[#allocation7 + $0xf0] sm:$0xff]
    %v161 = vld [vmem:[#allocation7 + $0xf8] sm:$0xff]
    %v162 = vld [vmem:[#allocation7 + $0x100] sm:$0xff]
    %v163 = vld [vmem:[#allocation7 + $0x108] sm:$0xff]
    %v164 = vld [vmem:[#allocation7 + $0x110] sm:$0xff]
    %v165 = vld [vmem:[#allocation7 + $0x118] sm:$0xff]
    %v166 = vld [vmem:[#allocation7 + $0x120] sm:$0xff]
    %v167 = vld [vmem:[#allocation7 + $0x128] sm:$0xff]
    %v168 = vld [vmem:[#allocation7 + $0x130] sm:$0xff]
    %v169 = vld [vmem:[#allocation7 + $0x138] sm:$0xff]
    %v170 = vld [vmem:[#allocation7 + $0x140] sm:$0xff]
    %v171 = vld [vmem:[#allocation7 + $0x148] sm:$0xff]
    %v172 = vld [vmem:[#allocation7 + $0x150] sm:$0xff]
    %v173 = vld [vmem:[#allocation7 + $0x158] sm:$0xff]
    %v174 = vld [vmem:[#allocation7 + $0x160] sm:$0xff]
    %v175 = vld [vmem:[#allocation7 + $0x168] sm:$0xff]
    %v176 = vld [vmem:[#allocation7 + $0x170] sm:$0xff]
    %v177 = vld [vmem:[#allocation7 + $0x178] sm:$0xff]
    %v178 = vld [vmem:[%s3] sm:$0x7]
    %v180 = vlaneseq
    %v181 = vshrl.u32 %v180, 7
    %v182 = vsub.s32 0, %v181
    %v183 = vrot.slane %v178, %v182
    %v184 = vlaneseq
    %v185 = vshrl.u32 %v184, 7
    %v186 = vsub.s32 1, %v185
    %v187 = vrot.slane %v178, %v186
    %v188 = vlaneseq
    %v189 = vshrl.u32 %v188, 7
    %v190 = vsub.s32 2, %v189
    %v191 = vrot.slane %v178, %v190
    %195 = vmatprep.subr.mxu0 %v131
    %196 = vmatpush1.msra.mxu0 %v130
    %197 = vmatprep.subr.mxu0 %v134
    %198 = vmatpush1.msra.mxu0 %v133
    %199 = vmatprep.subr.mxu0 %v137
    %200 = vmatpush1.msra.mxu0 %v136
    %201 = vmatprep.subr.mxu0 %v140
    %202 = vmatpush1.msra.mxu0 %v139
    %203 = vmatprep.subr.mxu0 %v143
    %204 = vmatpush1.msra.mxu0 %v142
    %205 = vmatprep.subr.mxu0 %v146
    %206 = vmatpush1.msra.mxu0 %v145
    %207 = vmatprep.subr.mxu0 %v149
    %208 = vmatpush1.msra.mxu0 %v148
    %209 = vmatprep.subr.mxu0 %v152
    %210 = vmatpush1.msra.mxu0 %v151
    %211 = vmatprep.subr.mxu0 %v155
    %212 = vmatpush1.msra.mxu0 %v154
    %213 = vmatprep.subr.mxu0 %v158
    %214 = vmatpush1.msra.mxu0 %v157
    %215 = vmatprep.subr.mxu0 %v161
    %216 = vmatpush1.msra.mxu0 %v160
    %217 = vmatprep.subr.mxu0 %v164
    %218 = vmatpush1.msra.mxu0 %v163
    %219 = vmatprep.subr.mxu0 %v167
    %220 = vmatpush1.msra.mxu0 %v166
    %221 = vmatprep.subr.mxu0 %v170
    %222 = vmatpush1.msra.mxu0 %v169
    %223 = vmatprep.subr.mxu0 %v173
    %224 = vmatpush1.msra.mxu0 %v172
    %225 = vmatprep.subr.mxu0 %v176
    %226 = vmatpush1.msra.mxu0 %v175
    %227 = vmatprep.subr.mxu0 0.0
    %228 = vmatpush1.msra.mxu0 0.0
    %229 = vmatprep.subr.mxu0 0.0
    %230 = vmatpush1.msra.mxu0 0.0
    %231 = vmatprep.subr.mxu0 0.0
    %232 = vmatpush1.msra.mxu0 0.0
    %233 = vmatprep.subr.mxu0 0.0
    %234 = vmatpush1.msra.mxu0 0.0
    %235 = vmatprep.subr.mxu0 0.0
    %236 = vmatpush1.msra.mxu0 0.0
    %237 = vmatprep.subr.mxu0 0.0
    %238 = vmatpush1.msra.mxu0 0.0
    %239 = vmatprep.subr.mxu0 0.0
    %240 = vmatpush1.msra.mxu0 0.0
    %241 = vmatprep.subr.mxu0 0.0
    %242 = vmatpush1.msra.mxu0 0.0
    %243 = vmatprep.subr.mxu0 0.0
    %244 = vmatpush1.msra.mxu0 0.0
    %245 = vmatprep.subr.mxu0 0.0
    %246 = vmatpush1.msra.mxu0 0.0
    %247 = vmatprep.subr.mxu0 0.0
    %248 = vmatpush1.msra.mxu0 0.0
    %249 = vmatprep.subr.mxu0 0.0
    %250 = vmatpush1.msra.mxu0 0.0
    %251 = vmatprep.subr.mxu0 0.0
    %252 = vmatpush1.msra.mxu0 0.0
    %253 = vmatprep.subr.mxu0 0.0
    %254 = vmatpush1.msra.mxu0 0.0
    %255 = vmatprep.subr.mxu0 0.0
    %256 = vmatpush1.msra.mxu0 0.0
    %257 = vmatprep.subr.mxu0 0.0
    %258 = vmatpush1.msra.mxu0 0.0
    %259 = vmatprep.mubr.f32.mxu0 0.0
    %260 = vmatmul.mubr.f32.gmra.mrb[0].mxu0 %v122
    %v261 = vpop.f32.mrb[0].mxu0
    %v262 = vadd.f32 %v183, %v261
    %v263 = vpop.f32.mrb[0].mxu0
    %v264 = vadd.f32 %v187, %v263
    %265 = vmatprep.mubr.f32.mxu0 0.0
    %266 = vmatmul.mubr.f32.gmra.mrb[0].mxu0 %v123
    %v267 = vpop.f32.mrb[0].mxu0
    %v268 = vadd.f32 %v183, %v267
    %v269 = vpop.f32.mrb[0].mxu0
    %v270 = vadd.f32 %v187, %v269
    %271 = vmatprep.mubr.f32.mxu0 0.0
    %272 = vmatmul.mubr.f32.gmra.mrb[0].mxu0 %v124
    %v273 = vpop.f32.mrb[0].mxu0
    %v274 = vadd.f32 %v183, %v273
    %v275 = vpop.f32.mrb[0].mxu0
    %v276 = vadd.f32 %v187, %v275
    %277 = vmatprep.mubr.f32.mxu0 0.0
    %278 = vmatmul.mubr.f32.gmra.mrb[0].mxu0 %v125
    %v279 = vpop.f32.mrb[0].mxu0
    %v280 = vadd.f32 %v183, %v279
    %v281 = vpop.f32.mrb[0].mxu0
    %v282 = vadd.f32 %v187, %v281
    %283 = vmatprep.mubr.f32.mxu0 0.0
    %284 = vmatmul.mubr.f32.gmra.mrb[0].mxu0 %v126
    %v285 = vpop.f32.mrb[0].mxu0
    %v286 = vadd.f32 %v183, %v285
    %v287 = vpop.f32.mrb[0].mxu0
    %v288 = vadd.f32 %v187, %v287
    %289 = vmatprep.mubr.f32.mxu0 0.0
    %290 = vmatmul.mubr.f32.gmra.mrb[0].mxu0 %v127
    %v291 = vpop.f32.mrb[0].mxu0
    %v292 = vadd.f32 %v183, %v291
    %v293 = vpop.f32.mrb[0].mxu0
    %v294 = vadd.f32 %v187, %v293
    %295 = vmatprep.mubr.f32.mxu0 0.0
    %296 = vmatmul.mubr.f32.gmra.mrb[0].mxu0 %v128
    %v297 = vpop.f32.mrb[0].mxu0
    %v298 = vadd.f32 %v183, %v297
    %v299 = vpop.f32.mrb[0].mxu0
    %v300 = vadd.f32 %v187, %v299
    %301 = vmatprep.mubr.f32.mxu0 0.0
    %302 = vmatmul.mubr.f32.gmra.mrb[0].mxu0 %v129
    %v303 = vpop.f32.mrb[0].mxu0
    %v304 = vadd.f32 %v183, %v303
    %v305 = vpop.f32.mrb[0].mxu0
    %v306 = vadd.f32 %v187, %v305
    %307 = vdwg.mxu0
    %308 = vmatprep.subr.mxu0 0.0
    %309 = vmatpush1.msra.mxu0 %v132
    %310 = vmatprep.subr.mxu0 0.0
    %311 = vmatpush1.msra.mxu0 %v135
    %312 = vmatprep.subr.mxu0 0.0
    %313 = vmatpush1.msra.mxu0 %v138
    %314 = vmatprep.subr.mxu0 0.0
    %315 = vmatpush1.msra.mxu0 %v141
    %316 = vmatprep.subr.mxu0 0.0
    %317 = vmatpush1.msra.mxu0 %v144
    %318 = vmatprep.subr.mxu0 0.0
    %319 = vmatpush1.msra.mxu0 %v147
    %320 = vmatprep.subr.mxu0 0.0
    %321 = vmatpush1.msra.mxu0 %v150
    %322 = vmatprep.subr.mxu0 0.0
    %323 = vmatpush1.msra.mxu0 %v153
    %324 = vmatprep.subr.mxu0 0.0
    %325 = vmatpush1.msra.mxu0 %v156
    %326 = vmatprep.subr.mxu0 0.0
    %327 = vmatpush1.msra.mxu0 %v159
    %328 = vmatprep.subr.mxu0 0.0
    %329 = vmatpush1.msra.mxu0 %v162
    %330 = vmatprep.subr.mxu0 0.0
    %331 = vmatpush1.msra.mxu0 %v165
    %332 = vmatprep.subr.mxu0 0.0
    %333 = vmatpush1.msra.mxu0 %v168
    %334 = vmatprep.subr.mxu0 0.0
    %335 = vmatpush1.msra.mxu0 %v171
    %336 = vmatprep.subr.mxu0 0.0
    %337 = vmatpush1.msra.mxu0 %v174
    %338 = vmatprep.subr.mxu0 0.0
    %339 = vmatpush1.msra.mxu0 %v177
    %340 = vmatprep.subr.mxu0 0.0
    %341 = vmatpush1.msra.mxu0 0.0
    %342 = vmatprep.subr.mxu0 0.0
    %343 = vmatpush1.msra.mxu0 0.0
    %344 = vmatprep.subr.mxu0 0.0
    %345 = vmatpush1.msra.mxu0 0.0
    %346 = vmatprep.subr.mxu0 0.0
    %347 = vmatpush1.msra.mxu0 0.0
    %348 = vmatprep.subr.mxu0 0.0
    %349 = vmatpush1.msra.mxu0 0.0
    %350 = vmatprep.subr.mxu0 0.0
    %351 = vmatpush1.msra.mxu0 0.0
    %352 = vmatprep.subr.mxu0 0.0
    %353 = vmatpush1.msra.mxu0 0.0
    %354 = vmatprep.subr.mxu0 0.0
    %355 = vmatpush1.msra.mxu0 0.0
    %356 = vmatprep.subr.mxu0 0.0
    %357 = vmatpush1.msra.mxu0 0.0
    %358 = vmatprep.subr.mxu0 0.0
    %359 = vmatpush1.msra.mxu0 0.0
    %360 = vmatprep.subr.mxu0 0.0
    %361 = vmatpush1.msra.mxu0 0.0
    %362 = vmatprep.subr.mxu0 0.0
    %363 = vmatpush1.msra.mxu0 0.0
    %364 = vmatprep.subr.mxu0 0.0
    %365 = vmatpush1.msra.mxu0 0.0
    %366 = vmatprep.subr.mxu0 0.0
    %367 = vmatpush1.msra.mxu0 0.0
    %368 = vmatprep.subr.mxu0 0.0
    %369 = vmatpush1.msra.mxu0 0.0
    %370 = vmatprep.subr.mxu0 0.0
    %371 = vmatpush1.msra.mxu0 0.0
    %372 = vmatprep.mubr.f32.mxu0 0.0
    %373 = vmatmul.mubr.f32.gmra.mrb[0].mxu0 %v122
    %v374 = vpop.f32.mrb[0].mxu0
    %v375 = vadd.f32 %v191, %v374
    %v376 = vpop.f32.mrb[0].mxu0
    %377 = vmatprep.mubr.f32.mxu0 0.0
    %378 = vmatmul.mubr.f32.gmra.mrb[0].mxu0 %v123
    %v379 = vpop.f32.mrb[0].mxu0
    %v380 = vadd.f32 %v191, %v379
    %v381 = vpop.f32.mrb[0].mxu0
    %382 = vmatprep.mubr.f32.mxu0 0.0
    %383 = vmatmul.mubr.f32.gmra.mrb[0].mxu0 %v124
    %v384 = vpop.f32.mrb[0].mxu0
    %v385 = vadd.f32 %v191, %v384
    %v386 = vpop.f32.mrb[0].mxu0
    %387 = vmatprep.mubr.f32.mxu0 0.0
    %388 = vmatmul.mubr.f32.gmra.mrb[0].mxu0 %v125
    %v389 = vpop.f32.mrb[0].mxu0
    %v390 = vadd.f32 %v191, %v389
    %v391 = vpop.f32.mrb[0].mxu0
    %392 = vmatprep.mubr.f32.mxu0 0.0
    %393 = vmatmul.mubr.f32.gmra.mrb[0].mxu0 %v126
    %v394 = vpop.f32.mrb[0].mxu0
    %v395 = vadd.f32 %v191, %v394
    %v396 = vpop.f32.mrb[0].mxu0
    %397 = vmatprep.mubr.f32.mxu0 0.0
    %398 = vmatmul.mubr.f32.gmra.mrb[0].mxu0 %v127
    %v399 = vpop.f32.mrb[0].mxu0
    %v400 = vadd.f32 %v191, %v399
    %v401 = vpop.f32.mrb[0].mxu0
    %402 = vmatprep.mubr.f32.mxu0 0.0
    %403 = vmatmul.mubr.f32.gmra.mrb[0].mxu0 %v128
    %v404 = vpop.f32.mrb[0].mxu0
    %v405 = vadd.f32 %v191, %v404
    %v406 = vpop.f32.mrb[0].mxu0
    %407 = vmatprep.mubr.f32.mxu0 0.0
    %408 = vmatmul.mubr.f32.gmra.mrb[0].mxu0 %v129
    %v409 = vpop.f32.mrb[0].mxu0
    %v410 = vadd.f32 %v191, %v409
    %v411 = vpop.f32.mrb[0].mxu0
    %412 = vdwg.mxu0
    %vm413 = vcmp.ge.f32.partialorder %v262, 0.0
    %vm414 = vcmp.ge.f32.partialorder %v264, 0.0
    %vm415 = vcmp.ge.f32.partialorder %v375, 0.0
    %vm416 = vcmp.ge.f32.partialorder %v268, 0.0
    %vm417 = vcmp.ge.f32.partialorder %v270, 0.0
    %vm418 = vcmp.ge.f32.partialorder %v380, 0.0
    %vm419 = vcmp.ge.f32.partialorder %v274, 0.0
    %vm420 = vcmp.ge.f32.partialorder %v276, 0.0
    %vm421 = vcmp.ge.f32.partialorder %v385, 0.0
    %vm422 = vcmp.ge.f32.partialorder %v280, 0.0
    %vm423 = vcmp.ge.f32.partialorder %v282, 0.0
    %vm424 = vcmp.ge.f32.partialorder %v390, 0.0
    %vm425 = vcmp.ge.f32.partialorder %v286, 0.0
    %vm426 = vcmp.ge.f32.partialorder %v288, 0.0
    %vm427 = vcmp.ge.f32.partialorder %v395, 0.0
    %vm428 = vcmp.ge.f32.partialorder %v292, 0.0
    %vm429 = vcmp.ge.f32.partialorder %v294, 0.0
    %vm430 = vcmp.ge.f32.partialorder %v400, 0.0
    %vm431 = vcmp.ge.f32.partialorder %v298, 0.0
    %vm432 = vcmp.ge.f32.partialorder %v300, 0.0
    %vm433 = vcmp.ge.f32.partialorder %v405, 0.0
    %vm434 = vcmp.ge.f32.partialorder %v304, 0.0
    %vm435 = vcmp.ge.f32.partialorder %v306, 0.0
    %vm436 = vcmp.ge.f32.partialorder %v410, 0.0
    %v437 = vmul.f32 %v262, 0.1
    %v438 = vmul.f32 %v264, 0.1
    %v439 = vmul.f32 %v375, 0.1
    %v440 = vmul.f32 %v268, 0.1
    %v441 = vmul.f32 %v270, 0.1
    %v442 = vmul.f32 %v380, 0.1
    %v443 = vmul.f32 %v274, 0.1
    %v444 = vmul.f32 %v276, 0.1
    %v445 = vmul.f32 %v385, 0.1
    %v446 = vmul.f32 %v280, 0.1
    %v447 = vmul.f32 %v282, 0.1
    %v448 = vmul.f32 %v390, 0.1
    %v449 = vmul.f32 %v286, 0.1
    %v450 = vmul.f32 %v288, 0.1
    %v451 = vmul.f32 %v395, 0.1
    %v452 = vmul.f32 %v292, 0.1
    %v453 = vmul.f32 %v294, 0.1
    %v454 = vmul.f32 %v400, 0.1
    %v455 = vmul.f32 %v298, 0.1
    %v456 = vmul.f32 %v300, 0.1
    %v457 = vmul.f32 %v405, 0.1
    %v458 = vmul.f32 %v304, 0.1
    %v459 = vmul.f32 %v306, 0.1
    %v460 = vmul.f32 %v410, 0.1
    %v461 = vsel %vm413, %v262, %v437
    %v462 = vsel %vm414, %v264, %v438
    %v463 = vsel %vm415, %v375, %v439
    %v464 = vsel %vm416, %v268, %v440
    %v465 = vsel %vm417, %v270, %v441
    %v466 = vsel %vm418, %v380, %v442
    %v467 = vsel %vm419, %v274, %v443
    %v468 = vsel %vm420, %v276, %v444
    %v469 = vsel %vm421, %v385, %v445
    %v470 = vsel %vm422, %v280, %v446
    %v471 = vsel %vm423, %v282, %v447
    %v472 = vsel %vm424, %v390, %v448
    %v473 = vsel %vm425, %v286, %v449
    %v474 = vsel %vm426, %v288, %v450
    %v475 = vsel %vm427, %v395, %v451
    %v476 = vsel %vm428, %v292, %v452
    %v477 = vsel %vm429, %v294, %v453
    %v478 = vsel %vm430, %v400, %v454
    %v479 = vsel %vm431, %v298, %v455
    %v480 = vsel %vm432, %v300, %v456
    %v481 = vsel %vm433, %v405, %v457
    %v482 = vsel %vm434, %v304, %v458
    %v483 = vsel %vm435, %v306, %v459
    %v484 = vsel %vm436, %v410, %v460
    %v485 = vld [vmem:[#allocation8] sm:$0xff]
    %v486 = vld [vmem:[#allocation8 + $0x8] sm:$0xff]
    %v487 = vld [vmem:[#allocation8 + $0x10] sm:$0xff]
    %v488 = vld [vmem:[#allocation8 + $0x18] sm:$0xff]
    %v489 = vld [vmem:[#allocation8 + $0x20] sm:$0xff]
    %v490 = vld [vmem:[#allocation8 + $0x28] sm:$0xff]
    %v491 = vld [vmem:[#allocation8 + $0x30] sm:$0xff]
    %v492 = vld [vmem:[#allocation8 + $0x38] sm:$0xff]
    %v493 = vld [vmem:[#allocation8 + $0x40] sm:$0xff]
    %v494 = vld [vmem:[#allocation8 + $0x48] sm:$0xff]
    %v495 = vld [vmem:[#allocation8 + $0x50] sm:$0xff]
    %v496 = vld [vmem:[#allocation8 + $0x58] sm:$0xff]
    %v497 = vld [vmem:[#allocation8 + $0x60] sm:$0xff]
    %v498 = vld [vmem:[#allocation8 + $0x68] sm:$0xff]
    %v499 = vld [vmem:[#allocation8 + $0x70] sm:$0xff]
    %v500 = vld [vmem:[#allocation8 + $0x78] sm:$0xff]
    %v501 = vld [vmem:[#allocation8 + $0x80] sm:$0xff]
    %v502 = vld [vmem:[#allocation8 + $0x88] sm:$0xff]
    %v503 = vld [vmem:[#allocation8 + $0x90] sm:$0xff]
    %v504 = vld [vmem:[#allocation8 + $0x98] sm:$0xff]
    %v505 = vld [vmem:[#allocation8 + $0xa0] sm:$0xff]
    %v506 = vld [vmem:[#allocation8 + $0xa8] sm:$0xff]
    %v507 = vld [vmem:[#allocation8 + $0xb0] sm:$0xff]
    %v508 = vld [vmem:[#allocation8 + $0xb8] sm:$0xff]
    %v509 = vld [vmem:[#allocation8 + $0xc0] sm:$0xff]
    %v510 = vld [vmem:[#allocation8 + $0xc8] sm:$0xff]
    %v511 = vld [vmem:[#allocation8 + $0xd0] sm:$0xff]
    %v512 = vld [vmem:[#allocation8 + $0xd8] sm:$0xff]
    %v513 = vld [vmem:[#allocation8 + $0xe0] sm:$0xff]
    %v514 = vld [vmem:[#allocation8 + $0xe8] sm:$0xff]
    %v515 = vld [vmem:[#allocation8 + $0xf0] sm:$0xff]
    %v516 = vld [vmem:[#allocation8 + $0xf8] sm:$0xff]
    %v517 = vld [vmem:[#allocation8 + $0x100] sm:$0xff]
    %v518 = vld [vmem:[#allocation8 + $0x108] sm:$0xff]
    %v519 = vld [vmem:[#allocation8 + $0x110] sm:$0xff]
    %v520 = vld [vmem:[#allocation8 + $0x118] sm:$0xff]
    %v521 = vld [vmem:[#allocation8 + $0x120] sm:$0xff]
    %v522 = vld [vmem:[#allocation8 + $0x128] sm:$0xff]
    %v523 = vld [vmem:[#allocation8 + $0x130] sm:$0xff]
    %v524 = vld [vmem:[#allocation8 + $0x138] sm:$0xff]
    %v525 = vld [vmem:[#allocation8 + $0x140] sm:$0xff]
    %v526 = vld [vmem:[#allocation8 + $0x148] sm:$0xff]
    %v527 = vld [vmem:[#allocation8 + $0x150] sm:$0xff]
    %v528 = vld [vmem:[#allocation8 + $0x158] sm:$0xff]
    %v529 = vld [vmem:[#allocation8 + $0x160] sm:$0xff]
    %v530 = vld [vmem:[#allocation8 + $0x168] sm:$0xff]
    %v531 = vld [vmem:[#allocation8 + $0x170] sm:$0xff]
    %v532 = vld [vmem:[#allocation8 + $0x178] sm:$0xff]
    %v533 = vld [vmem:[#allocation8 + $0x180] sm:$0xff]
    %v534 = vld [vmem:[#allocation8 + $0x188] sm:$0xff]
    %v535 = vld [vmem:[#allocation8 + $0x190] sm:$0xff]
    %v536 = vld [vmem:[#allocation8 + $0x198] sm:$0xff]
    %v537 = vld [vmem:[#allocation8 + $0x1a0] sm:$0xff]
    %v538 = vld [vmem:[#allocation8 + $0x1a8] sm:$0xff]
    %v539 = vld [vmem:[#allocation8 + $0x1b0] sm:$0xff]
    %v540 = vld [vmem:[#allocation8 + $0x1b8] sm:$0xff]
    %v541 = vld [vmem:[#allocation8 + $0x1c0] sm:$0xff]
    %v542 = vld [vmem:[#allocation8 + $0x1c8] sm:$0xff]
    %v543 = vld [vmem:[#allocation8 + $0x1d0] sm:$0xff]
    %v544 = vld [vmem:[#allocation8 + $0x1d8] sm:$0xff]
    %v545 = vld [vmem:[#allocation8 + $0x1e0] sm:$0xff]
    %v546 = vld [vmem:[#allocation8 + $0x1e8] sm:$0xff]
    %v547 = vld [vmem:[#allocation8 + $0x1f0] sm:$0xff]
    %v548 = vld [vmem:[#allocation8 + $0x1f8] sm:$0xff]
    %v549 = vld [vmem:[#allocation8 + $0x200] sm:$0xff]
    %v550 = vld [vmem:[#allocation8 + $0x208] sm:$0xff]
    %v551 = vld [vmem:[#allocation8 + $0x210] sm:$0xff]
    %v552 = vld [vmem:[#allocation8 + $0x218] sm:$0xff]
    %v553 = vld [vmem:[#allocation8 + $0x220] sm:$0xff]
    %v554 = vld [vmem:[#allocation8 + $0x228] sm:$0xff]
    %v555 = vld [vmem:[#allocation8 + $0x230] sm:$0xff]
    %v556 = vld [vmem:[#allocation8 + $0x238] sm:$0xff]
    %v557 = vld [vmem:[#allocation8 + $0x240] sm:$0xff]
    %v558 = vld [vmem:[#allocation8 + $0x248] sm:$0xff]
    %v559 = vld [vmem:[#allocation8 + $0x250] sm:$0xff]
    %v560 = vld [vmem:[#allocation8 + $0x258] sm:$0xff]
    %v561 = vld [vmem:[#allocation8 + $0x260] sm:$0xff]
    %v562 = vld [vmem:[#allocation8 + $0x268] sm:$0xff]
    %v563 = vld [vmem:[#allocation8 + $0x270] sm:$0xff]
    %v564 = vld [vmem:[#allocation8 + $0x278] sm:$0xff]
    %v565 = vld [vmem:[#allocation8 + $0x280] sm:$0xff]
    %v566 = vld [vmem:[#allocation8 + $0x288] sm:$0xff]
    %v567 = vld [vmem:[#allocation8 + $0x290] sm:$0xff]
    %v568 = vld [vmem:[#allocation8 + $0x298] sm:$0xff]
    %v569 = vld [vmem:[#allocation8 + $0x2a0] sm:$0xff]
    %v570 = vld [vmem:[#allocation8 + $0x2a8] sm:$0xff]
    %v571 = vld [vmem:[#allocation8 + $0x2b0] sm:$0xff]
    %v572 = vld [vmem:[#allocation8 + $0x2b8] sm:$0xff]
    %v573 = vld [vmem:[#allocation8 + $0x2c0] sm:$0xff]
    %v574 = vld [vmem:[#allocation8 + $0x2c8] sm:$0xff]
    %v575 = vld [vmem:[#allocation8 + $0x2d0] sm:$0xff]
    %v576 = vld [vmem:[#allocation8 + $0x2d8] sm:$0xff]
    %v577 = vld [vmem:[#allocation8 + $0x2e0] sm:$0xff]
    %v578 = vld [vmem:[#allocation8 + $0x2e8] sm:$0xff]
    %v579 = vld [vmem:[#allocation8 + $0x2f0] sm:$0xff]
    %v580 = vld [vmem:[#allocation8 + $0x2f8] sm:$0xff]
    %v581 = vld [vmem:[#allocation8 + $0x300] sm:$0xff]
    %v582 = vld [vmem:[#allocation8 + $0x308] sm:$0xff]
    %v583 = vld [vmem:[#allocation8 + $0x310] sm:$0xff]
    %v584 = vld [vmem:[#allocation8 + $0x318] sm:$0xff]
    %v585 = vld [vmem:[#allocation8 + $0x320] sm:$0xff]
    %v586 = vld [vmem:[#allocation8 + $0x328] sm:$0xff]
    %v587 = vld [vmem:[#allocation8 + $0x330] sm:$0xff]
    %v588 = vld [vmem:[#allocation8 + $0x338] sm:$0xff]
    %v589 = vld [vmem:[#allocation8 + $0x340] sm:$0xff]
    %v590 = vld [vmem:[#allocation8 + $0x348] sm:$0xff]
    %v591 = vld [vmem:[#allocation8 + $0x350] sm:$0xff]
    %v592 = vld [vmem:[#allocation8 + $0x358] sm:$0xff]
    %v593 = vld [vmem:[#allocation8 + $0x360] sm:$0xff]
    %v594 = vld [vmem:[#allocation8 + $0x368] sm:$0xff]
    %v595 = vld [vmem:[#allocation8 + $0x370] sm:$0xff]
    %v596 = vld [vmem:[#allocation8 + $0x378] sm:$0xff]
    %v597 = vld [vmem:[#allocation8 + $0x380] sm:$0xff]
    %v598 = vld [vmem:[#allocation8 + $0x388] sm:$0xff]
    %v599 = vld [vmem:[#allocation8 + $0x390] sm:$0xff]
    %v600 = vld [vmem:[#allocation8 + $0x398] sm:$0xff]
    %v601 = vld [vmem:[#allocation8 + $0x3a0] sm:$0xff]
    %v602 = vld [vmem:[#allocation8 + $0x3a8] sm:$0xff]
    %v603 = vld [vmem:[#allocation8 + $0x3b0] sm:$0xff]
    %v604 = vld [vmem:[#allocation8 + $0x3b8] sm:$0xff]
    %v605 = vld [vmem:[#allocation8 + $0x3c0] sm:$0xff]
    %v606 = vld [vmem:[#allocation8 + $0x3c8] sm:$0xff]
    %v607 = vld [vmem:[#allocation8 + $0x3d0] sm:$0xff]
    %v608 = vld [vmem:[#allocation8 + $0x3d8] sm:$0xff]
    %v609 = vld [vmem:[#allocation8 + $0x3e0] sm:$0xff]
    %v610 = vld [vmem:[#allocation8 + $0x3e8] sm:$0xff]
    %v611 = vld [vmem:[#allocation8 + $0x3f0] sm:$0xff]
    %v612 = vld [vmem:[#allocation8 + $0x3f8] sm:$0xff]
    %v613 = vld [vmem:[#allocation8 + $0x400] sm:$0xff]
    %v614 = vld [vmem:[#allocation8 + $0x408] sm:$0xff]
    %v615 = vld [vmem:[#allocation8 + $0x410] sm:$0xff]
    %v616 = vld [vmem:[#allocation8 + $0x418] sm:$0xff]
    %v617 = vld [vmem:[#allocation8 + $0x420] sm:$0xff]
    %v618 = vld [vmem:[#allocation8 + $0x428] sm:$0xff]
    %v619 = vld [vmem:[#allocation8 + $0x430] sm:$0xff]
    %v620 = vld [vmem:[#allocation8 + $0x438] sm:$0xff]
    %v621 = vld [vmem:[#allocation8 + $0x440] sm:$0xff]
    %v622 = vld [vmem:[#allocation8 + $0x448] sm:$0xff]
    %v623 = vld [vmem:[#allocation8 + $0x450] sm:$0xff]
    %v624 = vld [vmem:[#allocation8 + $0x458] sm:$0xff]
    %v625 = vld [vmem:[#allocation8 + $0x460] sm:$0xff]
    %v626 = vld [vmem:[#allocation8 + $0x468] sm:$0xff]
    %v627 = vld [vmem:[#allocation8 + $0x470] sm:$0xff]
    %v628 = vld [vmem:[#allocation8 + $0x478] sm:$0xff]
    %v629 = vld [vmem:[%s5] sm:$0x7]
    %v631 = vlaneseq
    %v632 = vshrl.u32 %v631, 7
    %v633 = vsub.s32 0, %v632
    %v634 = vrot.slane %v629, %v633
    %v635 = vlaneseq
    %v636 = vshrl.u32 %v635, 7
    %v637 = vsub.s32 1, %v636
    %v638 = vrot.slane %v629, %v637
    %v639 = vlaneseq
    %v640 = vshrl.u32 %v639, 7
    %v641 = vsub.s32 2, %v640
    %v642 = vrot.slane %v629, %v641
    %646 = vmatprep.subr.mxu0 %v486
    %647 = vmatpush1.msra.mxu0 %v485
    %648 = vmatprep.subr.mxu0 %v489
    %649 = vmatpush1.msra.mxu0 %v488
    %650 = vmatprep.subr.mxu0 %v492
    %651 = vmatpush1.msra.mxu0 %v491
    %652 = vmatprep.subr.mxu0 %v495
    %653 = vmatpush1.msra.mxu0 %v494
    %654 = vmatprep.subr.mxu0 %v498
    %655 = vmatpush1.msra.mxu0 %v497
    %656 = vmatprep.subr.mxu0 %v501
    %657 = vmatpush1.msra.mxu0 %v500
    %658 = vmatprep.subr.mxu0 %v504
    %659 = vmatpush1.msra.mxu0 %v503
    %660 = vmatprep.subr.mxu0 %v507
    %661 = vmatpush1.msra.mxu0 %v506
    %662 = vmatprep.subr.mxu0 %v510
    %663 = vmatpush1.msra.mxu0 %v509
    %664 = vmatprep.subr.mxu0 %v513
    %665 = vmatpush1.msra.mxu0 %v512
    %666 = vmatprep.subr.mxu0 %v516
    %667 = vmatpush1.msra.mxu0 %v515
    %668 = vmatprep.subr.mxu0 %v519
    %669 = vmatpush1.msra.mxu0 %v518
    %670 = vmatprep.subr.mxu0 %v522
    %671 = vmatpush1.msra.mxu0 %v521
    %672 = vmatprep.subr.mxu0 %v525
    %673 = vmatpush1.msra.mxu0 %v524
    %674 = vmatprep.subr.mxu0 %v528
    %675 = vmatpush1.msra.mxu0 %v527
    %676 = vmatprep.subr.mxu0 %v531
    %677 = vmatpush1.msra.mxu0 %v530
    %678 = vmatprep.subr.mxu0 %v534
    %679 = vmatpush1.msra.mxu0 %v533
    %680 = vmatprep.subr.mxu0 %v537
    %681 = vmatpush1.msra.mxu0 %v536
    %682 = vmatprep.subr.mxu0 %v540
    %683 = vmatpush1.msra.mxu0 %v539
    %684 = vmatprep.subr.mxu0 %v543
    %685 = vmatpush1.msra.mxu0 %v542
    %686 = vmatprep.subr.mxu0 %v546
    %687 = vmatpush1.msra.mxu0 %v545
    %688 = vmatprep.subr.mxu0 %v549
    %689 = vmatpush1.msra.mxu0 %v548
    %690 = vmatprep.subr.mxu0 %v552
    %691 = vmatpush1.msra.mxu0 %v551
    %692 = vmatprep.subr.mxu0 %v555
    %693 = vmatpush1.msra.mxu0 %v554
    %694 = vmatprep.subr.mxu0 %v558
    %695 = vmatpush1.msra.mxu0 %v557
    %696 = vmatprep.subr.mxu0 %v561
    %697 = vmatpush1.msra.mxu0 %v560
    %698 = vmatprep.subr.mxu0 %v564
    %699 = vmatpush1.msra.mxu0 %v563
    %700 = vmatprep.subr.mxu0 %v567
    %701 = vmatpush1.msra.mxu0 %v566
    %702 = vmatprep.subr.mxu0 %v570
    %703 = vmatpush1.msra.mxu0 %v569
    %704 = vmatprep.subr.mxu0 %v573
    %705 = vmatpush1.msra.mxu0 %v572
    %706 = vmatprep.subr.mxu0 %v576
    %707 = vmatpush1.msra.mxu0 %v575
    %708 = vmatprep.subr.mxu0 %v579
    %709 = vmatpush1.msra.mxu0 %v578
    %710 = vmatprep.mubr.f32.mxu0 %v462
    %711 = vmatmul.mubr.f32.gmra.mrb[0].mxu0 %v461
    %v712 = vpop.f32.mrb[0].mxu0
    %v713 = vadd.f32 %v634, %v712
    %v714 = vpop.f32.mrb[0].mxu0
    %v715 = vadd.f32 %v638, %v714
    %716 = vmatprep.mubr.f32.mxu0 %v465
    %717 = vmatmul.mubr.f32.gmra.mrb[0].mxu0 %v464
    %v718 = vpop.f32.mrb[0].mxu0
    %v719 = vadd.f32 %v634, %v718
    %v720 = vpop.f32.mrb[0].mxu0
    %v721 = vadd.f32 %v638, %v720
    %722 = vmatprep.mubr.f32.mxu0 %v468
    %723 = vmatmul.mubr.f32.gmra.mrb[0].mxu0 %v467
    %v724 = vpop.f32.mrb[0].mxu0
    %v725 = vadd.f32 %v634, %v724
    %v726 = vpop.f32.mrb[0].mxu0
    %v727 = vadd.f32 %v638, %v726
    %728 = vmatprep.mubr.f32.mxu0 %v471
    %729 = vmatmul.mubr.f32.gmra.mrb[0].mxu0 %v470
    %v730 = vpop.f32.mrb[0].mxu0
    %v731 = vadd.f32 %v634, %v730
    %v732 = vpop.f32.mrb[0].mxu0
    %v733 = vadd.f32 %v638, %v732
    %734 = vmatprep.mubr.f32.mxu0 %v474
    %735 = vmatmul.mubr.f32.gmra.mrb[0].mxu0 %v473
    %v736 = vpop.f32.mrb[0].mxu0
    %v737 = vadd.f32 %v634, %v736
    %v738 = vpop.f32.mrb[0].mxu0
    %v739 = vadd.f32 %v638, %v738
    %740 = vmatprep.mubr.f32.mxu0 %v477
    %741 = vmatmul.mubr.f32.gmra.mrb[0].mxu0 %v476
    %v742 = vpop.f32.mrb[0].mxu0
    %v743 = vadd.f32 %v634, %v742
    %v744 = vpop.f32.mrb[0].mxu0
    %v745 = vadd.f32 %v638, %v744
    %746 = vmatprep.mubr.f32.mxu0 %v480
    %747 = vmatmul.mubr.f32.gmra.mrb[0].mxu0 %v479
    %v748 = vpop.f32.mrb[0].mxu0
    %v749 = vadd.f32 %v634, %v748
    %v750 = vpop.f32.mrb[0].mxu0
    %v751 = vadd.f32 %v638, %v750
    %752 = vmatprep.mubr.f32.mxu0 %v483
    %753 = vmatmul.mubr.f32.gmra.mrb[0].mxu0 %v482
    %v754 = vpop.f32.mrb[0].mxu0
    %v755 = vadd.f32 %v634, %v754
    %v756 = vpop.f32.mrb[0].mxu0
    %v757 = vadd.f32 %v638, %v756
    %758 = vdwg.mxu0
    %759 = vmatprep.subr.mxu0 %v582
    %760 = vmatpush1.msra.mxu0 %v581
    %761 = vmatprep.subr.mxu0 %v585
    %762 = vmatpush1.msra.mxu0 %v584
    %763 = vmatprep.subr.mxu0 %v588
    %764 = vmatpush1.msra.mxu0 %v587
    %765 = vmatprep.subr.mxu0 %v591
    %766 = vmatpush1.msra.mxu0 %v590
    %767 = vmatprep.subr.mxu0 %v594
    %768 = vmatpush1.msra.mxu0 %v593
    %769 = vmatprep.subr.mxu0 %v597
    %770 = vmatpush1.msra.mxu0 %v596
    %771 = vmatprep.subr.mxu0 %v600
    %772 = vmatpush1.msra.mxu0 %v599
    %773 = vmatprep.subr.mxu0 %v603
    %774 = vmatpush1.msra.mxu0 %v602
    %775 = vmatprep.subr.mxu0 %v606
    %776 = vmatpush1.msra.mxu0 %v605
    %777 = vmatprep.subr.mxu0 %v609
    %778 = vmatpush1.msra.mxu0 %v608
    %779 = vmatprep.subr.mxu0 %v612
    %780 = vmatpush1.msra.mxu0 %v611
    %781 = vmatprep.subr.mxu0 %v615
    %782 = vmatpush1.msra.mxu0 %v614
    %783 = vmatprep.subr.mxu0 %v618
    %784 = vmatpush1.msra.mxu0 %v617
    %785 = vmatprep.subr.mxu0 %v621
    %786 = vmatpush1.msra.mxu0 %v620
    %787 = vmatprep.subr.mxu0 %v624
    %788 = vmatpush1.msra.mxu0 %v623
    %789 = vmatprep.subr.mxu0 %v627
    %790 = vmatpush1.msra.mxu0 %v626
    %791 = vmatprep.subr.mxu0 0.0
    %792 = vmatpush1.msra.mxu0 0.0
    %793 = vmatprep.subr.mxu0 0.0
    %794 = vmatpush1.msra.mxu0 0.0
    %795 = vmatprep.subr.mxu0 0.0
    %796 = vmatpush1.msra.mxu0 0.0
    %797 = vmatprep.subr.mxu0 0.0
    %798 = vmatpush1.msra.mxu0 0.0
    %799 = vmatprep.subr.mxu0 0.0
    %800 = vmatpush1.msra.mxu0 0.0
    %801 = vmatprep.subr.mxu0 0.0
    %802 = vmatpush1.msra.mxu0 0.0
    %803 = vmatprep.subr.mxu0 0.0
    %804 = vmatpush1.msra.mxu0 0.0
    %805 = vmatprep.subr.mxu0 0.0
    %806 = vmatpush1.msra.mxu0 0.0
    %807 = vmatprep.subr.mxu0 0.0
    %808 = vmatpush1.msra.mxu0 0.0
    %809 = vmatprep.subr.mxu0 0.0
    %810 = vmatpush1.msra.mxu0 0.0
    %811 = vmatprep.subr.mxu0 0.0
    %812 = vmatpush1.msra.mxu0 0.0
    %813 = vmatprep.subr.mxu0 0.0
    %814 = vmatpush1.msra.mxu0 0.0
    %815 = vmatprep.subr.mxu0 0.0
    %816 = vmatpush1.msra.mxu0 0.0
    %817 = vmatprep.subr.mxu0 0.0
    %818 = vmatpush1.msra.mxu0 0.0
    %819 = vmatprep.subr.mxu0 0.0
    %820 = vmatpush1.msra.mxu0 0.0
    %821 = vmatprep.subr.mxu0 0.0
    %822 = vmatpush1.msra.mxu0 0.0
    %823 = vmatprep.mubr.f32.mxu0 0.0
    %824 = vmatmul.mubr.f32.gmra.mrb[0].mxu0 %v463
    %v825 = vpop.f32.mrb[0].mxu0
    %v826 = vadd.f32 %v713, %v825
    %v827 = vpop.f32.mrb[0].mxu0
    %v828 = vadd.f32 %v715, %v827
    %829 = vmatprep.mubr.f32.mxu0 0.0
    %830 = vmatmul.mubr.f32.gmra.mrb[0].mxu0 %v466
    %v831 = vpop.f32.mrb[0].mxu0
    %v832 = vadd.f32 %v719, %v831
    %v833 = vpop.f32.mrb[0].mxu0
    %v834 = vadd.f32 %v721, %v833
    %835 = vmatprep.mubr.f32.mxu0 0.0
    %836 = vmatmul.mubr.f32.gmra.mrb[0].mxu0 %v469
    %v837 = vpop.f32.mrb[0].mxu0
    %v838 = vadd.f32 %v725, %v837
    %v839 = vpop.f32.mrb[0].mxu0
    %v840 = vadd.f32 %v727, %v839
    %841 = vmatprep.mubr.f32.mxu0 0.0
    %842 = vmatmul.mubr.f32.gmra.mrb[0].mxu0 %v472
    %v843 = vpop.f32.mrb[0].mxu0
    %v844 = vadd.f32 %v731, %v843
    %v845 = vpop.f32.mrb[0].mxu0
    %v846 = vadd.f32 %v733, %v845
    %847 = vmatprep.mubr.f32.mxu0 0.0
    %848 = vmatmul.mubr.f32.gmra.mrb[0].mxu0 %v475
    %v849 = vpop.f32.mrb[0].mxu0
    %v850 = vadd.f32 %v737, %v849
    %v851 = vpop.f32.mrb[0].mxu0
    %v852 = vadd.f32 %v739, %v851
    %853 = vmatprep.mubr.f32.mxu0 0.0
    %854 = vmatmul.mubr.f32.gmra.mrb[0].mxu0 %v478
    %v855 = vpop.f32.mrb[0].mxu0
    %v856 = vadd.f32 %v743, %v855
    %v857 = vpop.f32.mrb[0].mxu0
    %v858 = vadd.f32 %v745, %v857
    %859 = vmatprep.mubr.f32.mxu0 0.0
    %860 = vmatmul.mubr.f32.gmra.mrb[0].mxu0 %v481
    %v861 = vpop.f32.mrb[0].mxu0
    %v862 = vadd.f32 %v749, %v861
    %v863 = vpop.f32.mrb[0].mxu0
    %v864 = vadd.f32 %v751, %v863
    %865 = vmatprep.mubr.f32.mxu0 0.0
    %866 = vmatmul.mubr.f32.gmra.mrb[0].mxu0 %v484
    %v867 = vpop.f32.mrb[0].mxu0
    %v868 = vadd.f32 %v755, %v867
    %v869 = vpop.f32.mrb[0].mxu0
    %v870 = vadd.f32 %v757, %v869
    %871 = vdwg.mxu0
    %872 = vmatprep.subr.mxu0 0.0
    %873 = vmatpush1.msra.mxu0 %v487
    %874 = vmatprep.subr.mxu0 0.0
    %875 = vmatpush1.msra.mxu0 %v490
    %876 = vmatprep.subr.mxu0 0.0
    %877 = vmatpush1.msra.mxu0 %v493
    %878 = vmatprep.subr.mxu0 0.0
    %879 = vmatpush1.msra.mxu0 %v496
    %880 = vmatprep.subr.mxu0 0.0
    %881 = vmatpush1.msra.mxu0 %v499
    %882 = vmatprep.subr.mxu0 0.0
    %883 = vmatpush1.msra.mxu0 %v502
    %884 = vmatprep.subr.mxu0 0.0
    %885 = vmatpush1.msra.mxu0 %v505
    %886 = vmatprep.subr.mxu0 0.0
    %887 = vmatpush1.msra.mxu0 %v508
    %888 = vmatprep.subr.mxu0 0.0
    %889 = vmatpush1.msra.mxu0 %v511
    %890 = vmatprep.subr.mxu0 0.0
    %891 = vmatpush1.msra.mxu0 %v514
    %892 = vmatprep.subr.mxu0 0.0
    %893 = vmatpush1.msra.mxu0 %v517
    %894 = vmatprep.subr.mxu0 0.0
    %895 = vmatpush1.msra.mxu0 %v520
    %896 = vmatprep.subr.mxu0 0.0
    %897 = vmatpush1.msra.mxu0 %v523
    %898 = vmatprep.subr.mxu0 0.0
    %899 = vmatpush1.msra.mxu0 %v526
    %900 = vmatprep.subr.mxu0 0.0
    %901 = vmatpush1.msra.mxu0 %v529
    %902 = vmatprep.subr.mxu0 0.0
    %903 = vmatpush1.msra.mxu0 %v532
    %904 = vmatprep.subr.mxu0 0.0
    %905 = vmatpush1.msra.mxu0 %v535
    %906 = vmatprep.subr.mxu0 0.0
    %907 = vmatpush1.msra.mxu0 %v538
    %908 = vmatprep.subr.mxu0 0.0
    %909 = vmatpush1.msra.mxu0 %v541
    %910 = vmatprep.subr.mxu0 0.0
    %911 = vmatpush1.msra.mxu0 %v544
    %912 = vmatprep.subr.mxu0 0.0
    %913 = vmatpush1.msra.mxu0 %v547
    %914 = vmatprep.subr.mxu0 0.0
    %915 = vmatpush1.msra.mxu0 %v550
    %916 = vmatprep.subr.mxu0 0.0
    %917 = vmatpush1.msra.mxu0 %v553
    %918 = vmatprep.subr.mxu0 0.0
    %919 = vmatpush1.msra.mxu0 %v556
    %920 = vmatprep.subr.mxu0 0.0
    %921 = vmatpush1.msra.mxu0 %v559
    %922 = vmatprep.subr.mxu0 0.0
    %923 = vmatpush1.msra.mxu0 %v562
    %924 = vmatprep.subr.mxu0 0.0
    %925 = vmatpush1.msra.mxu0 %v565
    %926 = vmatprep.subr.mxu0 0.0
    %927 = vmatpush1.msra.mxu0 %v568
    %928 = vmatprep.subr.mxu0 0.0
    %929 = vmatpush1.msra.mxu0 %v571
    %930 = vmatprep.subr.mxu0 0.0
    %931 = vmatpush1.msra.mxu0 %v574
    %932 = vmatprep.subr.mxu0 0.0
    %933 = vmatpush1.msra.mxu0 %v577
    %934 = vmatprep.subr.mxu0 0.0
    %935 = vmatpush1.msra.mxu0 %v580
    %936 = vmatprep.mubr.f32.mxu0 %v462
    %937 = vmatmul.mubr.f32.gmra.mrb[0].mxu0 %v461
    %v938 = vpop.f32.mrb[0].mxu0
    %v939 = vadd.f32 %v642, %v938
    %v940 = vpop.f32.mrb[0].mxu0
    %941 = vmatprep.mubr.f32.mxu0 %v465
    %942 = vmatmul.mubr.f32.gmra.mrb[0].mxu0 %v464
    %v943 = vpop.f32.mrb[0].mxu0
    %v944 = vadd.f32 %v642, %v943
    %v945 = vpop.f32.mrb[0].mxu0
    %946 = vmatprep.mubr.f32.mxu0 %v468
    %947 = vmatmul.mubr.f32.gmra.mrb[0].mxu0 %v467
    %v948 = vpop.f32.mrb[0].mxu0
    %v949 = vadd.f32 %v642, %v948
    %v950 = vpop.f32.mrb[0].mxu0
    %951 = vmatprep.mubr.f32.mxu0 %v471
    %952 = vmatmul.mubr.f32.gmra.mrb[0].mxu0 %v470
    %v953 = vpop.f32.mrb[0].mxu0
    %v954 = vadd.f32 %v642, %v953
    %v955 = vpop.f32.mrb[0].mxu0
    %956 = vmatprep.mubr.f32.mxu0 %v474
    %957 = vmatmul.mubr.f32.gmra.mrb[0].mxu0 %v473
    %v958 = vpop.f32.mrb[0].mxu0
    %v959 = vadd.f32 %v642, %v958
    %v960 = vpop.f32.mrb[0].mxu0
    %961 = vmatprep.mubr.f32.mxu0 %v477
    %962 = vmatmul.mubr.f32.gmra.mrb[0].mxu0 %v476
    %v963 = vpop.f32.mrb[0].mxu0
    %v964 = vadd.f32 %v642, %v963
    %v965 = vpop.f32.mrb[0].mxu0
    %966 = vmatprep.mubr.f32.mxu0 %v480
    %967 = vmatmul.mubr.f32.gmra.mrb[0].mxu0 %v479
    %v968 = vpop.f32.mrb[0].mxu0
    %v969 = vadd.f32 %v642, %v968
    %v970 = vpop.f32.mrb[0].mxu0
    %971 = vmatprep.mubr.f32.mxu0 %v483
    %972 = vmatmul.mubr.f32.gmra.mrb[0].mxu0 %v482
    %v973 = vpop.f32.mrb[0].mxu0
    %v974 = vadd.f32 %v642, %v973
    %v975 = vpop.f32.mrb[0].mxu0
    %976 = vdwg.mxu0
    %977 = vmatprep.subr.mxu0 0.0
    %978 = vmatpush1.msra.mxu0 %v583
    %979 = vmatprep.subr.mxu0 0.0
    %980 = vmatpush1.msra.mxu0 %v586
    %981 = vmatprep.subr.mxu0 0.0
    %982 = vmatpush1.msra.mxu0 %v589
    %983 = vmatprep.subr.mxu0 0.0
    %984 = vmatpush1.msra.mxu0 %v592
    %985 = vmatprep.subr.mxu0 0.0
    %986 = vmatpush1.msra.mxu0 %v595
    %987 = vmatprep.subr.mxu0 0.0
    %988 = vmatpush1.msra.mxu0 %v598
    %989 = vmatprep.subr.mxu0 0.0
    %990 = vmatpush1.msra.mxu0 %v601
    %991 = vmatprep.subr.mxu0 0.0
    %992 = vmatpush1.msra.mxu0 %v604
    %993 = vmatprep.subr.mxu0 0.0
    %994 = vmatpush1.msra.mxu0 %v607
    %995 = vmatprep.subr.mxu0 0.0
    %996 = vmatpush1.msra.mxu0 %v610
    %997 = vmatprep.subr.mxu0 0.0
    %998 = vmatpush1.msra.mxu0 %v613
    %999 = vmatprep.subr.mxu0 0.0
    %1000 = vmatpush1.msra.mxu0 %v616
    %1001 = vmatprep.subr.mxu0 0.0
    %1002 = vmatpush1.msra.mxu0 %v619
    %1003 = vmatprep.subr.mxu0 0.0
    %1004 = vmatpush1.msra.mxu0 %v622
    %1005 = vmatprep.subr.mxu0 0.0
    %1006 = vmatpush1.msra.mxu0 %v625
    %1007 = vmatprep.subr.mxu0 0.0
    %1008 = vmatpush1.msra.mxu0 %v628
    %1009 = vmatprep.subr.mxu0 0.0
    %1010 = vmatpush1.msra.mxu0 0.0
    %1011 = vmatprep.subr.mxu0 0.0
    %1012 = vmatpush1.msra.mxu0 0.0
    %1013 = vmatprep.subr.mxu0 0.0
    %1014 = vmatpush1.msra.mxu0 0.0
    %1015 = vmatprep.subr.mxu0 0.0
    %1016 = vmatpush1.msra.mxu0 0.0
    %1017 = vmatprep.subr.mxu0 0.0
    %1018 = vmatpush1.msra.mxu0 0.0
    %1019 = vmatprep.subr.mxu0 0.0
    %1020 = vmatpush1.msra.mxu0 0.0
    %1021 = vmatprep.subr.mxu0 0.0
    %1022 = vmatpush1.msra.mxu0 0.0
    %1023 = vmatprep.subr.mxu0 0.0
    %1024 = vmatpush1.msra.mxu0 0.0
    %1025 = vmatprep.subr.mxu0 0.0
    %1026 = vmatpush1.msra.mxu0 0.0
    %1027 = vmatprep.subr.mxu0 0.0
    %1028 = vmatpush1.msra.mxu0 0.0
    %1029 = vmatprep.subr.mxu0 0.0
    %1030 = vmatpush1.msra.mxu0 0.0
    %1031 = vmatprep.subr.mxu0 0.0
    %1032 = vmatpush1.msra.mxu0 0.0
    %1033 = vmatprep.subr.mxu0 0.0
    %1034 = vmatpush1.msra.mxu0 0.0
    %1035 = vmatprep.subr.mxu0 0.0
    %1036 = vmatpush1.msra.mxu0 0.0
    %1037 = vmatprep.subr.mxu0 0.0
    %1038 = vmatpush1.msra.mxu0 0.0
    %1039 = vmatprep.subr.mxu0 0.0
    %1040 = vmatpush1.msra.mxu0 0.0
    %1041 = vmatprep.mubr.f32.mxu0 0.0
    %1042 = vmatmul.mubr.f32.gmra.mrb[0].mxu0 %v463
    %v1043 = vpop.f32.mrb[0].mxu0
    %v1044 = vadd.f32 %v939, %v1043
    %v1045 = vpop.f32.mrb[0].mxu0
    %1046 = vmatprep.mubr.f32.mxu0 0.0
    %1047 = vmatmul.mubr.f32.gmra.mrb[0].mxu0 %v466
    %v1048 = vpop.f32.mrb[0].mxu0
    %v1049 = vadd.f32 %v944, %v1048
    %v1050 = vpop.f32.mrb[0].mxu0
    %1051 = vmatprep.mubr.f32.mxu0 0.0
    %1052 = vmatmul.mubr.f32.gmra.mrb[0].mxu0 %v469
    %v1053 = vpop.f32.mrb[0].mxu0
    %v1054 = vadd.f32 %v949, %v1053
    %v1055 = vpop.f32.mrb[0].mxu0
    %1056 = vmatprep.mubr.f32.mxu0 0.0
    %1057 = vmatmul.mubr.f32.gmra.mrb[0].mxu0 %v472
    %v1058 = vpop.f32.mrb[0].mxu0
    %v1059 = vadd.f32 %v954, %v1058
    %v1060 = vpop.f32.mrb[0].mxu0
    %1061 = vmatprep.mubr.f32.mxu0 0.0
    %1062 = vmatmul.mubr.f32.gmra.mrb[0].mxu0 %v475
    %v1063 = vpop.f32.mrb[0].mxu0
    %v1064 = vadd.f32 %v959, %v1063
    %v1065 = vpop.f32.mrb[0].mxu0
    %1066 = vmatprep.mubr.f32.mxu0 0.0
    %1067 = vmatmul.mubr.f32.gmra.mrb[0].mxu0 %v478
    %v1068 = vpop.f32.mrb[0].mxu0
    %v1069 = vadd.f32 %v964, %v1068
    %v1070 = vpop.f32.mrb[0].mxu0
    %1071 = vmatprep.mubr.f32.mxu0 0.0
    %1072 = vmatmul.mubr.f32.gmra.mrb[0].mxu0 %v481
    %v1073 = vpop.f32.mrb[0].mxu0
    %v1074 = vadd.f32 %v969, %v1073
    %v1075 = vpop.f32.mrb[0].mxu0
    %1076 = vmatprep.mubr.f32.mxu0 0.0
    %1077 = vmatmul.mubr.f32.gmra.mrb[0].mxu0 %v484
    %v1078 = vpop.f32.mrb[0].mxu0
    %v1079 = vadd.f32 %v974, %v1078
    %v1080 = vpop.f32.mrb[0].mxu0
    %1081 = vdwg.mxu0
    %1082 = vst [vmem:[#allocation14] sm:$0xff] %v826
    %1083 = vst [vmem:[#allocation14 + $0x8] sm:$0xff] %v828
    %1084 = vst [vmem:[#allocation14 + $0x10] sm:$0xff] %v1044
    %1085 = vst [vmem:[#allocation14 + $0x18] sm:$0xff] %v832
    %1086 = vst [vmem:[#allocation14 + $0x20] sm:$0xff] %v834
    %1087 = vst [vmem:[#allocation14 + $0x28] sm:$0xff] %v1049
    %1088 = vst [vmem:[#allocation14 + $0x30] sm:$0xff] %v838
    %1089 = vst [vmem:[#allocation14 + $0x38] sm:$0xff] %v840
    %1090 = vst [vmem:[#allocation14 + $0x40] sm:$0xff] %v1054
    %1091 = vst [vmem:[#allocation14 + $0x48] sm:$0xff] %v844
    %1092 = vst [vmem:[#allocation14 + $0x50] sm:$0xff] %v846
    %1093 = vst [vmem:[#allocation14 + $0x58] sm:$0xff] %v1059
    %1094 = vst [vmem:[#allocation14 + $0x60] sm:$0xff] %v850
    %1095 = vst [vmem:[#allocation14 + $0x68] sm:$0xff] %v852
    %1096 = vst [vmem:[#allocation14 + $0x70] sm:$0xff] %v1064
    %1097 = vst [vmem:[#allocation14 + $0x78] sm:$0xff] %v856
    %1098 = vst [vmem:[#allocation14 + $0x80] sm:$0xff] %v858
    %1099 = vst [vmem:[#allocation14 + $0x88] sm:$0xff] %v1069
    %1100 = vst [vmem:[#allocation14 + $0x90] sm:$0xff] %v862
    %1101 = vst [vmem:[#allocation14 + $0x98] sm:$0xff] %v864
    %1102 = vst [vmem:[#allocation14 + $0xa0] sm:$0xff] %v1074
    %1103 = vst [vmem:[#allocation14 + $0xa8] sm:$0xff] %v868
    %1104 = vst [vmem:[#allocation14 + $0xb0] sm:$0xff] %v870
    %1105 = vst [vmem:[#allocation14 + $0xb8] sm:$0xff] %v1079
    %v1106 = vld [vmem:[#allocation5] sm:$0xff]
    %v1107 = vld [vmem:[#allocation5 + $0x8] sm:$0xff]
    %v1108 = vld [vmem:[#allocation5 + $0x10] sm:$0xff]
    %v1109 = vld [vmem:[#allocation5 + $0x18] sm:$0xff]
    %v1110 = vld [vmem:[#allocation5 + $0x20] sm:$0xff]
    %v1111 = vld [vmem:[#allocation5 + $0x28] sm:$0xff]
    %v1112 = vld [vmem:[#allocation5 + $0x30] sm:$0xff]
    %v1113 = vld [vmem:[#allocation5 + $0x38] sm:$0xff]
    %v1114 = vmul.f32 %v828, 0.5
    %v1115 = vmul.f32 %v834, 0.5
    %v1116 = vmul.f32 %v840, 0.5
    %v1117 = vmul.f32 %v846, 0.5
    %v1118 = vmul.f32 %v852, 0.5
    %v1119 = vmul.f32 %v858, 0.5
    %v1120 = vmul.f32 %v864, 0.5
    %v1121 = vmul.f32 %v870, 0.5
    %v1122 = vmul.f32 %v1114, 1.442695
    %v1123 = vpow.pop %v1122
    %v1124 = vmul.f32 %v1115, 1.442695
    %v1125 = vpow.pop %v1124
    %v1126 = vmul.f32 %v1116, 1.442695
    %v1127 = vpow.pop %v1126
    %v1128 = vmul.f32 %v1117, 1.442695
    %v1129 = vpow.pop %v1128
    %v1130 = vmul.f32 %v1118, 1.442695
    %v1131 = vpow.pop %v1130
    %v1132 = vmul.f32 %v1119, 1.442695
    %v1133 = vpow.pop %v1132
    %v1134 = vmul.f32 %v1120, 1.442695
    %v1135 = vpow.pop %v1134
    %v1136 = vmul.f32 %v1121, 1.442695
    %v1137 = vpow.pop %v1136
    %v1138 = vmul.f32 %v1106, %v1123
    %v1139 = vmul.f32 %v1107, %v1125
    %v1140 = vmul.f32 %v1108, %v1127
    %v1141 = vmul.f32 %v1109, %v1129
    %v1142 = vmul.f32 %v1110, %v1131
    %v1143 = vmul.f32 %v1111, %v1133
    %v1144 = vmul.f32 %v1112, %v1135
    %v1145 = vmul.f32 %v1113, %v1137
    %v1146 = vadd.f32 %v826, %v1138
    %v1147 = vadd.f32 %v832, %v1139
    %v1148 = vadd.f32 %v838, %v1140
    %v1149 = vadd.f32 %v844, %v1141
    %v1150 = vadd.f32 %v850, %v1142
    %v1151 = vadd.f32 %v856, %v1143
    %v1152 = vadd.f32 %v862, %v1144
    %v1153 = vadd.f32 %v868, %v1145
    %1154 = vst [vmem:[#allocation16] sm:$0xff] %v1146
    %1155 = vst [vmem:[#allocation16 + $0x8] sm:$0xff] %v1147
    %1156 = vst [vmem:[#allocation16 + $0x10] sm:$0xff] %v1148
    %1157 = vst [vmem:[#allocation16 + $0x18] sm:$0xff] %v1149
    %1158 = vst [vmem:[#allocation16 + $0x20] sm:$0xff] %v1150
    %1159 = vst [vmem:[#allocation16 + $0x28] sm:$0xff] %v1151
    %1160 = vst [vmem:[#allocation16 + $0x30] sm:$0xff] %v1152
    %1161 = vst [vmem:[#allocation16 + $0x38] sm:$0xff] %v1153
    %v1162 = vld [vmem:[#allocation10] sm:$0xff]
    %v1163 = vld [vmem:[#allocation10 + $0x8] sm:$0xff]
    %v1164 = vld [vmem:[#allocation10 + $0x10] sm:$0xff]
    %v1165 = vld [vmem:[#allocation10 + $0x18] sm:$0xff]
    %v1166 = vld [vmem:[#allocation10 + $0x20] sm:$0xff]
    %v1167 = vld [vmem:[#allocation10 + $0x28] sm:$0xff]
    %v1168 = vld [vmem:[#allocation10 + $0x30] sm:$0xff]
    %v1169 = vld [vmem:[#allocation10 + $0x38] sm:$0xff]
    %v1170 = vld [vmem:[#allocation10 + $0x40] sm:$0xff]
    %v1171 = vld [vmem:[#allocation10 + $0x48] sm:$0xff]
    %v1172 = vld [vmem:[#allocation10 + $0x50] sm:$0xff]
    %v1173 = vld [vmem:[#allocation10 + $0x58] sm:$0xff]
    %v1174 = vld [vmem:[#allocation10 + $0x60] sm:$0xff]
    %v1175 = vld [vmem:[#allocation10 + $0x68] sm:$0xff]
    %v1176 = vld [vmem:[#allocation10 + $0x70] sm:$0xff]
    %v1177 = vld [vmem:[#allocation10 + $0x78] sm:$0xff]
    %v1178 = vld [vmem:[%s7] sm:$0x1]
    %v1180 = vlaneseq
    %v1181 = vshrl.u32 %v1180, 7
    %v1182 = vsub.s32 0, %v1181
    %v1183 = vrot.slane %v1178, %v1182
    %1185 = vmatprep.subr.mxu0 0.0
    %1186 = vmatpush1.msra.mxu0 %v1162
    %1187 = vmatprep.subr.mxu0 0.0
    %1188 = vmatpush1.msra.mxu0 %v1163
    %1189 = vmatprep.subr.mxu0 0.0
    %1190 = vmatpush1.msra.mxu0 %v1164
    %1191 = vmatprep.subr.mxu0 0.0
    %1192 = vmatpush1.msra.mxu0 %v1165
    %1193 = vmatprep.subr.mxu0 0.0
    %1194 = vmatpush1.msra.mxu0 %v1166
    %1195 = vmatprep.subr.mxu0 0.0
    %1196 = vmatpush1.msra.mxu0 %v1167
    %1197 = vmatprep.subr.mxu0 0.0
    %1198 = vmatpush1.msra.mxu0 %v1168
    %1199 = vmatprep.subr.mxu0 0.0
    %1200 = vmatpush1.msra.mxu0 %v1169
    %1201 = vmatprep.subr.mxu0 0.0
    %1202 = vmatpush1.msra.mxu0 %v1170
    %1203 = vmatprep.subr.mxu0 0.0
    %1204 = vmatpush1.msra.mxu0 %v1171
    %1205 = vmatprep.subr.mxu0 0.0
    %1206 = vmatpush1.msra.mxu0 %v1172
    %1207 = vmatprep.subr.mxu0 0.0
    %1208 = vmatpush1.msra.mxu0 %v1173
    %1209 = vmatprep.subr.mxu0 0.0
    %1210 = vmatpush1.msra.mxu0 %v1174
    %1211 = vmatprep.subr.mxu0 0.0
    %1212 = vmatpush1.msra.mxu0 %v1175
    %1213 = vmatprep.subr.mxu0 0.0
    %1214 = vmatpush1.msra.mxu0 %v1176
    %1215 = vmatprep.subr.mxu0 0.0
    %1216 = vmatpush1.msra.mxu0 %v1177
    %1217 = vmatprep.subr.mxu0 0.0
    %1218 = vmatpush1.msra.mxu0 0.0
    %1219 = vmatprep.subr.mxu0 0.0
    %1220 = vmatpush1.msra.mxu0 0.0
    %1221 = vmatprep.subr.mxu0 0.0
    %1222 = vmatpush1.msra.mxu0 0.0
    %1223 = vmatprep.subr.mxu0 0.0
    %1224 = vmatpush1.msra.mxu0 0.0
    %1225 = vmatprep.subr.mxu0 0.0
    %1226 = vmatpush1.msra.mxu0 0.0
    %1227 = vmatprep.subr.mxu0 0.0
    %1228 = vmatpush1.msra.mxu0 0.0
    %1229 = vmatprep.subr.mxu0 0.0
    %1230 = vmatpush1.msra.mxu0 0.0
    %1231 = vmatprep.subr.mxu0 0.0
    %1232 = vmatpush1.msra.mxu0 0.0
    %1233 = vmatprep.subr.mxu0 0.0
    %1234 = vmatpush1.msra.mxu0 0.0
    %1235 = vmatprep.subr.mxu0 0.0
    %1236 = vmatpush1.msra.mxu0 0.0
    %1237 = vmatprep.subr.mxu0 0.0
    %1238 = vmatpush1.msra.mxu0 0.0
    %1239 = vmatprep.subr.mxu0 0.0
    %1240 = vmatpush1.msra.mxu0 0.0
    %1241 = vmatprep.subr.mxu0 0.0
    %1242 = vmatpush1.msra.mxu0 0.0
    %1243 = vmatprep.subr.mxu0 0.0
    %1244 = vmatpush1.msra.mxu0 0.0
    %1245 = vmatprep.subr.mxu0 0.0
    %1246 = vmatpush1.msra.mxu0 0.0
    %1247 = vmatprep.subr.mxu0 0.0
    %1248 = vmatpush1.msra.mxu0 0.0
    %1249 = vmatprep.mubr.f32.mxu0 0.0
    %1250 = vmatmul.mubr.f32.gmra.mrb[0].mxu0 %v1146
    %v1251 = vpop.f32.mrb[0].mxu0
    %v1252 = vadd.f32 %v1183, %v1251
    %v1253 = vpop.f32.mrb[0].mxu0
    %1254 = vmatprep.mubr.f32.mxu0 0.0
    %1255 = vmatmul.mubr.f32.gmra.mrb[0].mxu0 %v1147
    %v1256 = vpop.f32.mrb[0].mxu0
    %v1257 = vadd.f32 %v1183, %v1256
    %v1258 = vpop.f32.mrb[0].mxu0
    %1259 = vmatprep.mubr.f32.mxu0 0.0
    %1260 = vmatmul.mubr.f32.gmra.mrb[0].mxu0 %v1148
    %v1261 = vpop.f32.mrb[0].mxu0
    %v1262 = vadd.f32 %v1183, %v1261
    %v1263 = vpop.f32.mrb[0].mxu0
    %1264 = vmatprep.mubr.f32.mxu0 0.0
    %1265 = vmatmul.mubr.f32.gmra.mrb[0].mxu0 %v1149
    %v1266 = vpop.f32.mrb[0].mxu0
    %v1267 = vadd.f32 %v1183, %v1266
    %v1268 = vpop.f32.mrb[0].mxu0
    %1269 = vmatprep.mubr.f32.mxu0 0.0
    %1270 = vmatmul.mubr.f32.gmra.mrb[0].mxu0 %v1150
    %v1271 = vpop.f32.mrb[0].mxu0
    %v1272 = vadd.f32 %v1183, %v1271
    %v1273 = vpop.f32.mrb[0].mxu0
    %1274 = vmatprep.mubr.f32.mxu0 0.0
    %1275 = vmatmul.mubr.f32.gmra.mrb[0].mxu0 %v1151
    %v1276 = vpop.f32.mrb[0].mxu0
    %v1277 = vadd.f32 %v1183, %v1276
    %v1278 = vpop.f32.mrb[0].mxu0
    %1279 = vmatprep.mubr.f32.mxu0 0.0
    %1280 = vmatmul.mubr.f32.gmra.mrb[0].mxu0 %v1152
    %v1281 = vpop.f32.mrb[0].mxu0
    %v1282 = vadd.f32 %v1183, %v1281
    %v1283 = vpop.f32.mrb[0].mxu0
    %1284 = vmatprep.mubr.f32.mxu0 0.0
    %1285 = vmatmul.mubr.f32.gmra.mrb[0].mxu0 %v1153
    %v1286 = vpop.f32.mrb[0].mxu0
    %v1287 = vadd.f32 %v1183, %v1286
    %v1288 = vpop.f32.mrb[0].mxu0
    %1289 = vdwg.mxu0
    %vm1290 = vcmp.ge.f32.partialorder %v1252, 0.0
    %vm1291 = vcmp.ge.f32.partialorder %v1257, 0.0
    %vm1292 = vcmp.ge.f32.partialorder %v1262, 0.0
    %vm1293 = vcmp.ge.f32.partialorder %v1267, 0.0
    %vm1294 = vcmp.ge.f32.partialorder %v1272, 0.0
    %vm1295 = vcmp.ge.f32.partialorder %v1277, 0.0
    %vm1296 = vcmp.ge.f32.partialorder %v1282, 0.0
    %vm1297 = vcmp.ge.f32.partialorder %v1287, 0.0
    %v1298 = vmul.f32 %v1252, 0.1
    %v1299 = vmul.f32 %v1257, 0.1
    %v1300 = vmul.f32 %v1262, 0.1
    %v1301 = vmul.f32 %v1267, 0.1
    %v1302 = vmul.f32 %v1272, 0.1
    %v1303 = vmul.f32 %v1277, 0.1
    %v1304 = vmul.f32 %v1282, 0.1
    %v1305 = vmul.f32 %v1287, 0.1
    %v1306 = vsel %vm1290, %v1252, %v1298
    %v1307 = vsel %vm1291, %v1257, %v1299
    %v1308 = vsel %vm1292, %v1262, %v1300
    %v1309 = vsel %vm1293, %v1267, %v1301
    %v1310 = vsel %vm1294, %v1272, %v1302
    %v1311 = vsel %vm1295, %v1277, %v1303
    %v1312 = vsel %vm1296, %v1282, %v1304
    %v1313 = vsel %vm1297, %v1287, %v1305
    %v1314 = vld [vmem:[#allocation11] sm:$0xff]
    %v1315 = vld [vmem:[#allocation11 + $0x8] sm:$0xff]
    %v1316 = vld [vmem:[#allocation11 + $0x10] sm:$0xff]
    %v1317 = vld [vmem:[#allocation11 + $0x18] sm:$0xff]
    %v1318 = vld [vmem:[#allocation11 + $0x20] sm:$0xff]
    %v1319 = vld [vmem:[#allocation11 + $0x28] sm:$0xff]
    %v1320 = vld [vmem:[#allocation11 + $0x30] sm:$0xff]
    %v1321 = vld [vmem:[#allocation11 + $0x38] sm:$0xff]
    %v1322 = vld [vmem:[#allocation11 + $0x40] sm:$0xff]
    %v1323 = vld [vmem:[#allocation11 + $0x48] sm:$0xff]
    %v1324 = vld [vmem:[#allocation11 + $0x50] sm:$0xff]
    %v1325 = vld [vmem:[#allocation11 + $0x58] sm:$0xff]
    %v1326 = vld [vmem:[#allocation11 + $0x60] sm:$0xff]
    %v1327 = vld [vmem:[#allocation11 + $0x68] sm:$0xff]
    %v1328 = vld [vmem:[#allocation11 + $0x70] sm:$0xff]
    %v1329 = vld [vmem:[#allocation11 + $0x78] sm:$0xff]
    %v1330 = vld [vmem:[%s9] sm:$0x1]
    %v1332 = vlaneseq
    %v1333 = vshrl.u32 %v1332, 7
    %v1334 = vsub.s32 0, %v1333
    %v1335 = vrot.slane %v1330, %v1334
    %1337 = vmatprep.subr.mxu0 0.0
    %1338 = vmatpush1.msra.mxu0 %v1314
    %1339 = vmatprep.subr.mxu0 0.0
    %1340 = vmatpush1.msra.mxu0 %v1315
    %1341 = vmatprep.subr.mxu0 0.0
    %1342 = vmatpush1.msra.mxu0 %v1316
    %1343 = vmatprep.subr.mxu0 0.0
    %1344 = vmatpush1.msra.mxu0 %v1317
    %1345 = vmatprep.subr.mxu0 0.0
    %1346 = vmatpush1.msra.mxu0 %v1318
    %1347 = vmatprep.subr.mxu0 0.0
    %1348 = vmatpush1.msra.mxu0 %v1319
    %1349 = vmatprep.subr.mxu0 0.0
    %1350 = vmatpush1.msra.mxu0 %v1320
    %1351 = vmatprep.subr.mxu0 0.0
    %1352 = vmatpush1.msra.mxu0 %v1321
    %1353 = vmatprep.subr.mxu0 0.0
    %1354 = vmatpush1.msra.mxu0 %v1322
    %1355 = vmatprep.subr.mxu0 0.0
    %1356 = vmatpush1.msra.mxu0 %v1323
    %1357 = vmatprep.subr.mxu0 0.0
    %1358 = vmatpush1.msra.mxu0 %v1324
    %1359 = vmatprep.subr.mxu0 0.0
    %1360 = vmatpush1.msra.mxu0 %v1325
    %1361 = vmatprep.subr.mxu0 0.0
    %1362 = vmatpush1.msra.mxu0 %v1326
    %1363 = vmatprep.subr.mxu0 0.0
    %1364 = vmatpush1.msra.mxu0 %v1327
    %1365 = vmatprep.subr.mxu0 0.0
    %1366 = vmatpush1.msra.mxu0 %v1328
    %1367 = vmatprep.subr.mxu0 0.0
    %1368 = vmatpush1.msra.mxu0 %v1329
    %1369 = vmatprep.subr.mxu0 0.0
    %1370 = vmatpush1.msra.mxu0 0.0
    %1371 = vmatprep.subr.mxu0 0.0
    %1372 = vmatpush1.msra.mxu0 0.0
    %1373 = vmatprep.subr.mxu0 0.0
    %1374 = vmatpush1.msra.mxu0 0.0
    %1375 = vmatprep.subr.mxu0 0.0
    %1376 = vmatpush1.msra.mxu0 0.0
    %1377 = vmatprep.subr.mxu0 0.0
    %1378 = vmatpush1.msra.mxu0 0.0
    %1379 = vmatprep.subr.mxu0 0.0
    %1380 = vmatpush1.msra.mxu0 0.0
    %1381 = vmatprep.subr.mxu0 0.0
    %1382 = vmatpush1.msra.mxu0 0.0
    %1383 = vmatprep.subr.mxu0 0.0
    %1384 = vmatpush1.msra.mxu0 0.0
    %1385 = vmatprep.subr.mxu0 0.0
    %1386 = vmatpush1.msra.mxu0 0.0
    %1387 = vmatprep.subr.mxu0 0.0
    %1388 = vmatpush1.msra.mxu0 0.0
    %1389 = vmatprep.subr.mxu0 0.0
    %1390 = vmatpush1.msra.mxu0 0.0
    %1391 = vmatprep.subr.mxu0 0.0
    %1392 = vmatpush1.msra.mxu0 0.0
    %1393 = vmatprep.subr.mxu0 0.0
    %1394 = vmatpush1.msra.mxu0 0.0
    %1395 = vmatprep.subr.mxu0 0.0
    %1396 = vmatpush1.msra.mxu0 0.0
    %1397 = vmatprep.subr.mxu0 0.0
    %1398 = vmatpush1.msra.mxu0 0.0
    %1399 = vmatprep.subr.mxu0 0.0
    %1400 = vmatpush1.msra.mxu0 0.0
    %1401 = vmatprep.mubr.f32.mxu0 0.0
    %1402 = vmatmul.mubr.f32.gmra.mrb[0].mxu0 %v1306
    %v1403 = vpop.f32.mrb[0].mxu0
    %v1404 = vadd.f32 %v1335, %v1403
    %v1405 = vpop.f32.mrb[0].mxu0
    %1406 = vmatprep.mubr.f32.mxu0 0.0
    %1407 = vmatmul.mubr.f32.gmra.mrb[0].mxu0 %v1307
    %v1408 = vpop.f32.mrb[0].mxu0
    %v1409 = vadd.f32 %v1335, %v1408
    %v1410 = vpop.f32.mrb[0].mxu0
    %1411 = vmatprep.mubr.f32.mxu0 0.0
    %1412 = vmatmul.mubr.f32.gmra.mrb[0].mxu0 %v1308
    %v1413 = vpop.f32.mrb[0].mxu0
    %v1414 = vadd.f32 %v1335, %v1413
    %v1415 = vpop.f32.mrb[0].mxu0
    %1416 = vmatprep.mubr.f32.mxu0 0.0
    %1417 = vmatmul.mubr.f32.gmra.mrb[0].mxu0 %v1309
    %v1418 = vpop.f32.mrb[0].mxu0
    %v1419 = vadd.f32 %v1335, %v1418
    %v1420 = vpop.f32.mrb[0].mxu0
    %1421 = vmatprep.mubr.f32.mxu0 0.0
    %1422 = vmatmul.mubr.f32.gmra.mrb[0].mxu0 %v1310
    %v1423 = vpop.f32.mrb[0].mxu0
    %v1424 = vadd.f32 %v1335, %v1423
    %v1425 = vpop.f32.mrb[0].mxu0
    %1426 = vmatprep.mubr.f32.mxu0 0.0
    %1427 = vmatmul.mubr.f32.gmra.mrb[0].mxu0 %v1311
    %v1428 = vpop.f32.mrb[0].mxu0
    %v1429 = vadd.f32 %v1335, %v1428
    %v1430 = vpop.f32.mrb[0].mxu0
    %1431 = vmatprep.mubr.f32.mxu0 0.0
    %1432 = vmatmul.mubr.f32.gmra.mrb[0].mxu0 %v1312
    %v1433 = vpop.f32.mrb[0].mxu0
    %v1434 = vadd.f32 %v1335, %v1433
    %v1435 = vpop.f32.mrb[0].mxu0
    %1436 = vmatprep.mubr.f32.mxu0 0.0
    %1437 = vmatmul.mubr.f32.gmra.mrb[0].mxu0 %v1313
    %v1438 = vpop.f32.mrb[0].mxu0
    %v1439 = vadd.f32 %v1335, %v1438
    %v1440 = vpop.f32.mrb[0].mxu0
    %1441 = vdwg.mxu0
    %v1442 = vsub.f32 0.0, %v1404
    %v1443 = vsub.f32 0.0, %v1409
    %v1444 = vsub.f32 0.0, %v1414
    %v1445 = vsub.f32 0.0, %v1419
    %v1446 = vsub.f32 0.0, %v1424
    %v1447 = vsub.f32 0.0, %v1429
    %v1448 = vsub.f32 0.0, %v1434
    %v1449 = vsub.f32 0.0, %v1439
    %v1450 = vmul.f32 %v1442, 1.442695
    %v1451 = vpow.pop %v1450
    %v1452 = vmul.f32 %v1443, 1.442695
    %v1453 = vpow.pop %v1452
    %v1454 = vmul.f32 %v1444, 1.442695
    %v1455 = vpow.pop %v1454
    %v1456 = vmul.f32 %v1445, 1.442695
    %v1457 = vpow.pop %v1456
    %v1458 = vmul.f32 %v1446, 1.442695
    %v1459 = vpow.pop %v1458
    %v1460 = vmul.f32 %v1447, 1.442695
    %v1461 = vpow.pop %v1460
    %v1462 = vmul.f32 %v1448, 1.442695
    %v1463 = vpow.pop %v1462
    %v1464 = vmul.f32 %v1449, 1.442695
    %v1465 = vpow.pop %v1464
    %v1466 = vadd.f32 %v1451, 1.0
    %v1467 = vadd.f32 %v1453, 1.0
    %v1468 = vadd.f32 %v1455, 1.0
    %v1469 = vadd.f32 %v1457, 1.0
    %v1470 = vadd.f32 %v1459, 1.0
    %v1471 = vadd.f32 %v1461, 1.0
    %v1472 = vadd.f32 %v1463, 1.0
    %v1473 = vadd.f32 %v1465, 1.0
    %v1474 = vrcp.pop %v1466
    %v1475 = vmul.f32 1.0, %v1474
    %v1476 = vrcp.pop %v1467
    %v1477 = vmul.f32 1.0, %v1476
    %v1478 = vrcp.pop %v1468
    %v1479 = vmul.f32 1.0, %v1478
    %v1480 = vrcp.pop %v1469
    %v1481 = vmul.f32 1.0, %v1480
    %v1482 = vrcp.pop %v1470
    %v1483 = vmul.f32 1.0, %v1482
    %v1484 = vrcp.pop %v1471
    %v1485 = vmul.f32 1.0, %v1484
    %v1486 = vrcp.pop %v1472
    %v1487 = vmul.f32 1.0, %v1486
    %v1488 = vrcp.pop %v1473
    %v1489 = vmul.f32 1.0, %v1488
    %1490 = vst [vmem:[#allocation13] sm:$0xff] %v1475
    %1491 = vst [vmem:[#allocation13 + $0x8] sm:$0xff] %v1477
    %1492 = vst [vmem:[#allocation13 + $0x10] sm:$0xff] %v1479
    %1493 = vst [vmem:[#allocation13 + $0x18] sm:$0xff] %v1481
    %1494 = vst [vmem:[#allocation13 + $0x20] sm:$0xff] %v1483
    %1495 = vst [vmem:[#allocation13 + $0x28] sm:$0xff] %v1485
    %1496 = vst [vmem:[#allocation13 + $0x30] sm:$0xff] %v1487
    %1497 = vst [vmem:[#allocation13 + $0x38] sm:$0xff] %v1489
    // Predicated region
    $region66: #{tpu_custom_call.1} parent=1 // pred_check
      _
    $region67: #{tpu_custom_call.1} parent=1 // pred_check_branch
      %1499 = sbr.rel (0) target = $region69
    $region68: #{tpu_custom_call.1} parent=1 // pred_region
      %s1501 = ssub.s32 1024, 1024
      %1502 = vsyncadd [#allocation4], %s1501
      %s1503 = sshll.u32 [#allocation13], 4
      %s1504 = int_to_ptr.vmem [resolvable:$true] %s1503
      %1509 = dma.vmem_to_hbm [thread:$0]  %s1504, 1024, %s10, [#allocation4], 128, 128, 8
    $region69: #{tpu_custom_call.1} parent=1 // pred_fallthru
      _
    // Predicated region
    $region70: #{tpu_custom_call.1} parent=1 // pred_check
      _
    $region71: #{tpu_custom_call.1} parent=1 // pred_check_branch
      %1511 = sbr.rel (0) target = $region73
    $region72: #{tpu_custom_call.1} parent=1 // pred_region
      %s1513 = ssub.s32 3072, 3072
      %1514 = vsyncadd [#allocation15], %s1513
      %s1515 = sshll.u32 [#allocation14], 4
      %s1516 = int_to_ptr.vmem [resolvable:$true] %s1515
      %1521 = dma.vmem_to_hbm [thread:$0]  %s1516, 3072, %s11, [#allocation15], 384, 384, 24
    $region73: #{tpu_custom_call.1} parent=1 // pred_fallthru
      _
    // Predicated region
    $region74: #{tpu_custom_call.1} parent=1 // pred_check
      _
    $region75: #{tpu_custom_call.1} parent=1 // pred_check_branch
      %1523 = sbr.rel (0) target = $region77
    $region76: #{tpu_custom_call.1} parent=1 // pred_region
      %s1525 = ssub.s32 1024, 1024
      %1526 = vsyncadd [#allocation15], %s1525
      %s1527 = sshll.u32 [#allocation16], 4
      %s1528 = int_to_ptr.vmem [resolvable:$true] %s1527
      %1533 = dma.vmem_to_hbm [thread:$0]  %s1528, 1024, %s12, [#allocation15], 128, 128, 8
    $region77: #{tpu_custom_call.1} parent=1 // pred_fallthru
      _
    // Predicated region
    $region78: #{tpu_custom_call.1} parent=1 // pred_check
      _
    $region79: #{tpu_custom_call.1} parent=1 // pred_check_branch
      %1535 = sbr.rel (0) target = $region81
    $region80: #{tpu_custom_call.1} parent=1 // pred_region
      %1536 = dma.done [#allocation4], 1024
    $region81: #{tpu_custom_call.1} parent=1 // pred_fallthru
      _
    // Predicated region
    $region82: #{tpu_custom_call.1} parent=1 // pred_check
      _
    $region83: #{tpu_custom_call.1} parent=1 // pred_check_branch
      %1538 = sbr.rel (0) target = $region85
    $region84: #{tpu_custom_call.1} parent=1 // pred_region
      %1539 = dma.done [#allocation15], 3072
    $region85: #{tpu_custom_call.1} parent=1 // pred_fallthru
      _
    // Predicated region
    $region86: #{tpu_custom_call.1} parent=1 // pred_check
      _
    $region87: #{tpu_custom_call.1} parent=1 // pred_check_branch
      %1541 = sbr.rel (0) target = $region89
    $region88: #{tpu_custom_call.1} parent=1 // pred_region
      %1542 = dma.done [#allocation15], 1024
    $region89: #{tpu_custom_call.1} parent=1 // pred_fallthru
      _
    %1543 = vsyncpa [#allocation3], 1
    %1544 = vsyncpa [#allocation6], 1
    %1545 = vsyncpa [#allocation9], 1
    %1546 = vsyncpa [#allocation12], 1
    %1547 = vsyncpa [#allocation4], 1
    %1548 = vsyncpa [#allocation15], 1

</llo_original>
